<compile_context>
chip_gen: v5e
topology: v5e:2x2
jax: 0.10.0
libtpu: 0.0.40
codegen_flags: <defaults>
</compile_context>

<pallas_src>
import functools
import math

import numpy as np
import jax
import jax.numpy as jnp
from jax.experimental import pallas as pl
from jax.experimental.pallas import tpu as pltpu


def silu_normalize2mom_const() -> float:
    """cst such that silu(z)*cst has unit second moment for z ~ N(0,1).

    Deterministic quadrature (equivalent to e3nn's normalize2mom constant for
    SiLU, ~1.6791).
    """
    z = np.linspace(-12.0, 12.0, 480001, dtype=np.float64)
    dz = z[1] - z[0]
    phi = np.exp(-0.5 * z * z) / np.sqrt(2.0 * np.pi)
    silu = z / (1.0 + np.exp(-z))
    m2 = float(np.sum(silu * silu * phi) * dz)
    return m2 ** -0.5


def _round_up(n: int, m: int) -> int:
    return (n + m - 1) // m * m


def fold_scales_into_params(weights, biases, scales, *,
                            compute_dtype=jnp.float32):
    """One-time init transform (NOT a per-call wrapper multiply).

    Folds the static per-layer scale (norm_from_last / sqrt(h_in)) into the
    weights and biases and casts weights to the MXU operand dtype. Biases stay
    f32 (they are added to the f32 accumulator). No output padding anymore.
    """
    ws, bs = [], []
    for w, b, s in zip(weights, biases, scales):
        wf = jnp.asarray(w, jnp.float32) * jnp.float32(s)
        bf = jnp.asarray(b, jnp.float32) * jnp.float32(s)
        ws.append(wf.astype(compute_dtype))   # MXU RHS dtype
        bs.append(bf.reshape(1, -1))          # f32, added to f32 accumulator
    return ws, bs


def _mlp_kernel(num_layers, compute_dtype, *refs):
    """Fused MLP: refs = (x_ref, w0, b0, w1, b1, ..., out_ref).

    Weights/biases already carry the per-layer scale; matmuls accumulate in
    f32; SiLU runs in f32 on the VPU/EUP; intermediate activations are cast
    back to compute_dtype only to feed the next MXU matmul.
    """
    x_ref = refs[0]
    out_ref = refs[-1]
    wb = refs[1:-1]

    h = x_ref[...].astype(compute_dtype)      # cast in-register, not in XLA
    for layer in range(num_layers):
        w = wb[2 * layer][...]
        b = wb[2 * layer + 1][...]                     # (1, h_out) f32
        acc = jnp.dot(h, w, preferred_element_type=jnp.float32) + b
        if layer < num_layers - 1:
            acc = acc * jax.nn.sigmoid(acc)            # SiLU in f32
            h = acc.astype(compute_dtype)
        else:
            h = acc
    out_ref[...] = h.astype(out_ref.dtype)


def _choose_tile_m(n_rows: int, tile_m: int) -> int:
    """Pick an M tile: large to amortize ~0.35us/step, >=2 steps for v7x."""
    tile_m = min(_round_up(max(int(tile_m), 8), 8), 4096)
    n8 = _round_up(n_rows, 8)
    if n8 <= tile_m:
        if n8 >= 16:
            # Force at least two grid steps so the "parallel" axis can shard
            # across v7x's two TensorCores (near-free on v5e/v6e).
            tile_m = _round_up(pl.cdiv(n_rows, 2), 8)
        else:
            tile_m = n8
    return tile_m


def mlp_forward(x, scaled_weights, scaled_biases, *,
                tile_m=2048, compute_dtype=jnp.float32, out_dtype=None):
    """Run the fused MLP kernel.

    x:              (N, input_dim), any float dtype (cast in-kernel)
    scaled_weights: list of (h_in, h_out) with scale folded in
    scaled_biases:  list of (1, h_out) f32 with scale folded in
    """
    N, in_dim = x.shape
    num_layers = len(scaled_weights)
    out_dim = int(scaled_weights[-1].shape[1])
    if out_dtype is None:
        out_dtype = x.dtype

    tile_m = _choose_tile_m(N, tile_m)
    grid = (pl.cdiv(N, tile_m),)     # ragged last block handled by Pallas

    kernel = functools.partial(_mlp_kernel, num_layers, compute_dtype)

    in_specs = [pl.BlockSpec((tile_m, in_dim), lambda i: (i, 0))]
    args = [x]
    for w, b in zip(scaled_weights, scaled_biases):
        # Resident weight/bias tiles (constant index_map). At these widths the
        # VMEM footprint is tiny on all of v5e/v6e/v7x; if the MLP ever widens
        # enough to pressure VMEM (esp. v7x 64 MiB), switch these specs to
        # pipeline_mode=pl.Buffered(1) and set vmem_limit_bytes explicitly.
        in_specs.append(pl.BlockSpec(w.shape, lambda i: (0, 0)))
        in_specs.append(pl.BlockSpec(b.shape, lambda i: (0, 0)))
        args.append(w)
        args.append(b)

    # Output block's last dim equals the full array last dim, so no 128-lane
    # padding is required; stores are masked (vst.msk) but HBM write bytes are
    # the true out_dim width rather than 16x-inflated.
    out_specs = pl.BlockSpec((tile_m, out_dim), lambda i: (i, 0))

    return pl.pallas_call(
        kernel,
        out_shape=jax.ShapeDtypeStruct((N, out_dim), out_dtype),
        grid_spec=pltpu.PrefetchScalarGridSpec(
            num_scalar_prefetch=0,
            grid=grid,
            in_specs=in_specs,
            out_specs=out_specs,
        ),
        compiler_params=pltpu.CompilerParams(
            dimension_semantics=("parallel",)),
    )(*args)


def mlp_reference(x, weights, biases, scales, *, compute_dtype=jnp.float32):
    """Pure-JAX reference (mirrors the torch fx graph, same dtype policy)."""
    num_layers = len(weights)
    h = x.astype(compute_dtype)
    for layer, (w, b, s) in enumerate(zip(weights, biases, scales)):
        wf = (jnp.asarray(w, jnp.float32) * jnp.float32(s)).astype(compute_dtype)
        bf = jnp.asarray(b, jnp.float32) * jnp.float32(s)
        h = jnp.dot(h, wf, preferred_element_type=jnp.float32) + bf
        if layer < num_layers - 1:
            h = h * jax.nn.sigmoid(h)
            h = h.astype(compute_dtype)
    return h.astype(x.dtype)


if __name__ == "__main__":
    # Module config (small, consistent with MultiLayerPerceptronTorchGraph).
    input_dim = 16
    hidden_dims = [32, 64]
    output_dim = 8
    N = 500  # not a multiple of 8 or of the tile; exercises the ragged block

    dimensions = [input_dim] + hidden_dims + [output_dim]
    num_layers = len(dimensions) - 1
    nonlin_const = silu_normalize2mom_const()

    # Deterministic parameter init: w.normal_(), b.normal_() per layer.
    key = jax.random.PRNGKey(0)
    keys = jax.random.split(key, 2 * num_layers + 1)
    weights, biases, scales = [], [], []
    norm_from_last = 1.0
    for layer, (h_in, h_out) in enumerate(zip(dimensions, dimensions[1:])):
        w = jax.random.normal(keys[2 * layer], (h_in, h_out), dtype=jnp.float32)
        b = jax.random.normal(keys[2 * layer + 1], (h_out,), dtype=jnp.float32)
        weights.append(w)
        biases.append(b)
        scales.append(norm_from_last / math.sqrt(float(h_in)))
        if layer < num_layers - 1:
            norm_from_last = nonlin_const

    x = jax.random.normal(keys[-1], (N, input_dim), dtype=jnp.float32)

    # --- f32 path (exact semantics; tight tolerance) ---
    ws32, bs32 = fold_scales_into_params(
        weights, biases, scales, compute_dtype=jnp.float32)
    out32 = jax.block_until_ready(
        mlp_forward(x, ws32, bs32, compute_dtype=jnp.float32))
    ref32 = jax.block_until_ready(
        mlp_reference(x, weights, biases, scales, compute_dtype=jnp.float32))
    assert out32.shape == (N, output_dim)
    if not np.allclose(np.asarray(out32), np.asarray(ref32),
                       rtol=1e-5, atol=1e-5):
        raise AssertionError("f32 Pallas MLP kernel does not match reference")

    # --- bf16 MXU-operand path (v5e/v6e/v7x): bf16 operands, f32 accumulate,
    #     f32 bias + SiLU; output kept in f32 here for comparison ---
    wsbf, bsbf = fold_scales_into_params(
        weights, biases, scales, compute_dtype=jnp.bfloat16)
    outbf = jax.block_until_ready(
        mlp_forward(x, wsbf, bsbf, compute_dtype=jnp.bfloat16,
                    out_dtype=jnp.float32))
    refbf = jax.block_until_ready(
        mlp_reference(x, weights, biases, scales,
                      compute_dtype=jnp.bfloat16)).astype(jnp.float32)
    if not np.allclose(np.asarray(outbf), np.asarray(refbf),
                       rtol=2e-2, atol=2e-2):
        raise AssertionError("bf16 Pallas MLP kernel does not match reference")

    print("KERNEL_OK")
</pallas_src>

<mosaic_0001>
module attributes {stable_mosaic.version = 11 : i64} {
  func.func @_mlp_kernel(%arg0: i32, %arg1: memref<256x16xf32, #tpu.memory_space<vmem>>, %arg2: memref<16x32xf32, #tpu.memory_space<vmem>>, %arg3: memref<1x32xf32, #tpu.memory_space<vmem>>, %arg4: memref<32x64xf32, #tpu.memory_space<vmem>>, %arg5: memref<1x64xf32, #tpu.memory_space<vmem>>, %arg6: memref<64x8xf32, #tpu.memory_space<vmem>>, %arg7: memref<1x8xf32, #tpu.memory_space<vmem>>, %arg8: memref<256x8xf32, #tpu.memory_space<vmem>>) attributes {dimension_semantics = [#tpu.dimension_semantics<parallel>], iteration_bounds = array<i64: 2>, scalar_prefetch = 0 : i64, scratch_operands = 0 : i64, tpu.core_type = #tpu.core_type<tc>, window_params = [{transform_indices = @transform_0, window_bounds = array<i64: 256, 16>}, {pipeline_mode = #tpu.pipeline_mode<synchronous>, transform_indices = @transform_1, window_bounds = array<i64: 16, 32>}, {pipeline_mode = #tpu.pipeline_mode<synchronous>, transform_indices = @transform_2, window_bounds = array<i64: 1, 32>}, {pipeline_mode = #tpu.pipeline_mode<synchronous>, transform_indices = @transform_3, window_bounds = array<i64: 32, 64>}, {pipeline_mode = #tpu.pipeline_mode<synchronous>, transform_indices = @transform_4, window_bounds = array<i64: 1, 64>}, {pipeline_mode = #tpu.pipeline_mode<synchronous>, transform_indices = @transform_5, window_bounds = array<i64: 64, 8>}, {pipeline_mode = #tpu.pipeline_mode<synchronous>, transform_indices = @transform_6, window_bounds = array<i64: 1, 8>}, {transform_indices = @transform_7, window_bounds = array<i64: 256, 8>}]} {
    %c0 = arith.constant 0 : index
    %c0_0 = arith.constant 0 : index
    %0 = vector.load %arg1[%c0, %c0_0] : memref<256x16xf32, #tpu.memory_space<vmem>>, vector<256x16xf32>
    %c0_1 = arith.constant 0 : index
    %c0_2 = arith.constant 0 : index
    %1 = vector.load %arg2[%c0_1, %c0_2] : memref<16x32xf32, #tpu.memory_space<vmem>>, vector<16x32xf32>
    %c0_3 = arith.constant 0 : index
    %c0_4 = arith.constant 0 : index
    %2 = vector.load %arg3[%c0_3, %c0_4] : memref<1x32xf32, #tpu.memory_space<vmem>>, vector<1x32xf32>
    %cst = arith.constant dense<0.000000e+00> : vector<256x32xf32>
    %3 = tpu.matmul %0, %1, %cst {dimension_numbers = #tpu.dot_dimension_numbers<[1], [0], [0], [1], [0, 0, 1, 1], [], []>} : vector<256x16xf32>, vector<16x32xf32>, vector<256x32xf32> -> vector<256x32xf32>
    %4 = vector.broadcast %2 : vector<1x32xf32> to vector<256x32xf32>
    %5 = arith.addf %3, %4 : vector<256x32xf32>
    %6 = arith.negf %5 : vector<256x32xf32>
    %7 = math.exp %6 : vector<256x32xf32>
    %cst_5 = arith.constant 1.000000e+00 : f32
    %8 = vector.broadcast %cst_5 : f32 to vector<256x32xf32>
    %9 = arith.addf %8, %7 : vector<256x32xf32>
    %10 = arith.divf %8, %9 : vector<256x32xf32>
    %11 = arith.mulf %5, %10 : vector<256x32xf32>
    %c0_6 = arith.constant 0 : index
    %c0_7 = arith.constant 0 : index
    %12 = vector.load %arg4[%c0_6, %c0_7] : memref<32x64xf32, #tpu.memory_space<vmem>>, vector<32x64xf32>
    %c0_8 = arith.constant 0 : index
    %c0_9 = arith.constant 0 : index
    %13 = vector.load %arg5[%c0_8, %c0_9] : memref<1x64xf32, #tpu.memory_space<vmem>>, vector<1x64xf32>
    %cst_10 = arith.constant dense<0.000000e+00> : vector<256x64xf32>
    %14 = tpu.matmul %11, %12, %cst_10 {dimension_numbers = #tpu.dot_dimension_numbers<[1], [0], [0], [1], [0, 0, 1, 1], [], []>} : vector<256x32xf32>, vector<32x64xf32>, vector<256x64xf32> -> vector<256x64xf32>
    %15 = vector.broadcast %13 : vector<1x64xf32> to vector<256x64xf32>
    %16 = arith.addf %14, %15 : vector<256x64xf32>
    %17 = arith.negf %16 : vector<256x64xf32>
    %18 = math.exp %17 : vector<256x64xf32>
    %cst_11 = arith.constant 1.000000e+00 : f32
    %19 = vector.broadcast %cst_11 : f32 to vector<256x64xf32>
    %20 = arith.addf %19, %18 : vector<256x64xf32>
    %21 = arith.divf %19, %20 : vector<256x64xf32>
    %22 = arith.mulf %16, %21 : vector<256x64xf32>
    %c0_12 = arith.constant 0 : index
    %c0_13 = arith.constant 0 : index
    %23 = vector.load %arg6[%c0_12, %c0_13] : memref<64x8xf32, #tpu.memory_space<vmem>>, vector<64x8xf32>
    %c0_14 = arith.constant 0 : index
    %c0_15 = arith.constant 0 : index
    %24 = vector.load %arg7[%c0_14, %c0_15] : memref<1x8xf32, #tpu.memory_space<vmem>>, vector<1x8xf32>
    %cst_16 = arith.constant dense<0.000000e+00> : vector<256x8xf32>
    %25 = tpu.matmul %22, %23, %cst_16 {dimension_numbers = #tpu.dot_dimension_numbers<[1], [0], [0], [1], [0, 0, 1, 1], [], []>} : vector<256x64xf32>, vector<64x8xf32>, vector<256x8xf32> -> vector<256x8xf32>
    %26 = vector.broadcast %24 : vector<1x8xf32> to vector<256x8xf32>
    %27 = arith.addf %25, %26 : vector<256x8xf32>
    %c0_17 = arith.constant 0 : index
    %c0_18 = arith.constant 0 : index
    %28 = vector.load %arg8[%c0_17, %c0_18] : memref<256x8xf32, #tpu.memory_space<vmem>>, vector<256x8xf32>
    tpu.vector_store %arg8[%c0_17, %c0_18], %27 {strides = array<i32>} : memref<256x8xf32, #tpu.memory_space<vmem>>, vector<256x8xf32>,
    return
  }
  func.func @transform_0(%arg0: i32) -> (i32, i32) {
    %c0_i32 = arith.constant 0 : i32
    %c0_i32_0 = arith.constant 0 : i32
    return %arg0, %c0_i32 : i32, i32
  }
  func.func @transform_1(%arg0: i32) -> (i32, i32) {
    %c0_i32 = arith.constant 0 : i32
    %c0_i32_0 = arith.constant 0 : i32
    %c0_i32_1 = arith.constant 0 : i32
    return %c0_i32, %c0_i32_0 : i32, i32
  }
  func.func @transform_2(%arg0: i32) -> (i32, i32) {
    %c0_i32 = arith.constant 0 : i32
    %c0_i32_0 = arith.constant 0 : i32
    %c0_i32_1 = arith.constant 0 : i32
    return %c0_i32, %c0_i32_0 : i32, i32
  }
  func.func @transform_3(%arg0: i32) -> (i32, i32) {
    %c0_i32 = arith.constant 0 : i32
    %c0_i32_0 = arith.constant 0 : i32
    %c0_i32_1 = arith.constant 0 : i32
    return %c0_i32, %c0_i32_0 : i32, i32
  }
  func.func @transform_4(%arg0: i32) -> (i32, i32) {
    %c0_i32 = arith.constant 0 : i32
    %c0_i32_0 = arith.constant 0 : i32
    %c0_i32_1 = arith.constant 0 : i32
    return %c0_i32, %c0_i32_0 : i32, i32
  }
  func.func @transform_5(%arg0: i32) -> (i32, i32) {
    %c0_i32 = arith.constant 0 : i32
    %c0_i32_0 = arith.constant 0 : i32
    %c0_i32_1 = arith.constant 0 : i32
    return %c0_i32, %c0_i32_0 : i32, i32
  }
  func.func @transform_6(%arg0: i32) -> (i32, i32) {
    %c0_i32 = arith.constant 0 : i32
    %c0_i32_0 = arith.constant 0 : i32
    %c0_i32_1 = arith.constant 0 : i32
    return %c0_i32, %c0_i32_0 : i32, i32
  }
  func.func @transform_7(%arg0: i32) -> (i32, i32) {
    %c0_i32 = arith.constant 0 : i32
    %c0_i32_0 = arith.constant 0 : i32
    return %arg0, %c0_i32 : i32, i32
  }
}

</mosaic_0001>

<llo_original>
// kernel: tpu_custom_call.1
$region0: #{tpu_custom_call.1}
  #allocation0 [shape = 'u32[]', space=smem, size = 0x4, offset = 0x4, fixed_abs, tag = 'smem constant byte address 0x4 - core index']
  #allocation1 [shape = 'u32[72,128]{1,0:T(1,128)}', space=vmem, size = 0x9000, scoped, tag = 'internal scratch']
  %s0 = inlined_call_operand.vmem [shape: f32[500,16], index: 0, kind: input, shape index: {}]
  %s1 = inlined_call_operand.vmem [shape: f32[16,32], index: 1, kind: input, shape index: {}]
  %s2 = inlined_call_operand.vmem [shape: f32[1,32], index: 2, kind: input, shape index: {}]
  %s3 = inlined_call_operand.vmem [shape: f32[32,64], index: 3, kind: input, shape index: {}]
  %s4 = inlined_call_operand.vmem [shape: f32[1,64], index: 4, kind: input, shape index: {}]
  %s5 = inlined_call_operand.vmem [shape: f32[64,8], index: 5, kind: input, shape index: {}]
  %s6 = inlined_call_operand.vmem [shape: f32[1,8], index: 6, kind: input, shape index: {}]
  %s7 = inlined_call_operand.vmem [shape: f32[500,8], index: 7, kind: output, shape index: {}]
  %s8 = sld [smem:[#allocation0]]
  $region109: #{tpu_custom_call.1} parent=0
    _
  %s10 = ssub.s32 1, %s8
  %s11 = scalar_select 0, %s10, %s8
  $region1: #{tpu_custom_call.1} parent=0
    #allocation2 [shape = 'u8[262144]{0}', space=vmem, size = 0x40000, scoped, tag = 'output window, operand 0']
    loop: start=0, step=1, limit=4
    $region2: #{tpu_custom_call.1} parent=1 // loop_pre_header
      _
    $region3: #{tpu_custom_call.1} parent=1 // loop_header
      %s13 = sphi 0, %s17
      %p14 = scmp.ge.s32.totalorder %s13, 4
      %s23 = sphi 0, %s25
      %s26 = sphi 0, %s23
      %s27 = sphi 0, %s26
      %s43 = sphi 0, %s27
      %s47 = sphi 0, %s47
      %s49 = sphi 0, %s47
      %s50 = sphi 0, %s49
      %s64 = sphi 0, %s50
      %s68 = sphi 0, %s68
      %s70 = sphi 0, %s68
      %s71 = sphi 0, %s70
      %s85 = sphi 0, %s71
      %s89 = sphi 0, %s89
      %s91 = sphi 0, %s89
      %s92 = sphi 0, %s91
      %s106 = sphi 0, %s92
      %s110 = sphi 0, %s110
      %s112 = sphi 0, %s110
      %s113 = sphi 0, %s112
      %s127 = sphi 0, %s113
      %s131 = sphi 0, %s131
      %s133 = sphi 0, %s131
      %s134 = sphi 0, %s133
      %s148 = sphi 0, %s134
      %s152 = sphi 0, %s152
      %s154 = sphi 0, %s152
      %s155 = sphi 0, %s154
      %s169 = sphi 0, %s155
      %s175 = sphi 0, %s177
      %s178 = sphi 0, %s175
      %s179 = sphi 0, %s178
      %s195 = sphi 0, %s179
    $region4: #{tpu_custom_call.1} parent=1 // loop_header_branch
      %16 = sbr.rel (%p14) target = $region8
    $region5: #{tpu_custom_call.1} parent=1 // loop_body
      %s18 = ssub.s32 %s13, 1
      %s19 = ssub.s32 %s13, 2
      %s20 = sadd.s32 %s13, 1
      %s21 = ssub.s32 %s13, %s20
      %p22 = scmp.eq.s32.totalorder %s21, 0
      %s24 = sadd.s32 %s23, 1
      %s25 = scalar_select %p22, %s23, %s24
      %p28 = pneg %p22
      %p29 = scmp.eq.s32.totalorder %s13, 1
      %p30 = por %p28, %p29
      %p31 = scmp.ne.s32.totalorder %s23, %s26
      %p32 = scmp.eq.s32.totalorder %s13, 0
      %p33 = por %p31, %p32
      %p34 = scmp.ne.s32.totalorder %s23, %s26
      %p35 = scmp.eq.s32.totalorder %s18, 1
      %p36 = por %p34, %p35
      %p37 = scmp.ne.s32.totalorder %s26, %s27
      %p38 = scmp.eq.s32.totalorder %s18, 0
      %p39 = por %p37, %p38
      %p40 = scmp.ne.s32.totalorder %s26, %s27
      %p41 = scmp.eq.s32.totalorder %s19, 1
      %p42 = por %p40, %p41
      %p44 = scmp.ne.s32.totalorder %s27, %s43
      %p45 = scmp.eq.s32.totalorder %s19, 0
      %p46 = por %p44, %p45
      %s48 = sadd.s32 %s47, 1
      %p51 = scmp.eq.s32.totalorder %s13, 1
      %p52 = scmp.ne.s32.totalorder %s47, %s49
      %p53 = scmp.eq.s32.totalorder %s13, 0
      %p54 = por %p52, %p53
      %p55 = scmp.ne.s32.totalorder %s47, %s49
      %p56 = scmp.eq.s32.totalorder %s18, 1
      %p57 = por %p55, %p56
      %p58 = scmp.ne.s32.totalorder %s49, %s50
      %p59 = scmp.eq.s32.totalorder %s18, 0
      %p60 = por %p58, %p59
      %p61 = scmp.ne.s32.totalorder %s49, %s50
      %p62 = scmp.eq.s32.totalorder %s19, 1
      %p63 = por %p61, %p62
      %p65 = scmp.ne.s32.totalorder %s50, %s64
      %p66 = scmp.eq.s32.totalorder %s19, 0
      %p67 = por %p65, %p66
      %s69 = sadd.s32 %s68, 1
      %p72 = scmp.eq.s32.totalorder %s13, 1
      %p73 = scmp.ne.s32.totalorder %s68, %s70
      %p74 = scmp.eq.s32.totalorder %s13, 0
      %p75 = por %p73, %p74
      %p76 = scmp.ne.s32.totalorder %s68, %s70
      %p77 = scmp.eq.s32.totalorder %s18, 1
      %p78 = por %p76, %p77
      %p79 = scmp.ne.s32.totalorder %s70, %s71
      %p80 = scmp.eq.s32.totalorder %s18, 0
      %p81 = por %p79, %p80
      %p82 = scmp.ne.s32.totalorder %s70, %s71
      %p83 = scmp.eq.s32.totalorder %s19, 1
      %p84 = por %p82, %p83
      %p86 = scmp.ne.s32.totalorder %s71, %s85
      %p87 = scmp.eq.s32.totalorder %s19, 0
      %p88 = por %p86, %p87
      %s90 = sadd.s32 %s89, 1
      %p93 = scmp.eq.s32.totalorder %s13, 1
      %p94 = scmp.ne.s32.totalorder %s89, %s91
      %p95 = scmp.eq.s32.totalorder %s13, 0
      %p96 = por %p94, %p95
      %p97 = scmp.ne.s32.totalorder %s89, %s91
      %p98 = scmp.eq.s32.totalorder %s18, 1
      %p99 = por %p97, %p98
      %p100 = scmp.ne.s32.totalorder %s91, %s92
      %p101 = scmp.eq.s32.totalorder %s18, 0
      %p102 = por %p100, %p101
      %p103 = scmp.ne.s32.totalorder %s91, %s92
      %p104 = scmp.eq.s32.totalorder %s19, 1
      %p105 = por %p103, %p104
      %p107 = scmp.ne.s32.totalorder %s92, %s106
      %p108 = scmp.eq.s32.totalorder %s19, 0
      %p109 = por %p107, %p108
      %s111 = sadd.s32 %s110, 1
      %p114 = scmp.eq.s32.totalorder %s13, 1
      %p115 = scmp.ne.s32.totalorder %s110, %s112
      %p116 = scmp.eq.s32.totalorder %s13, 0
      %p117 = por %p115, %p116
      %p118 = scmp.ne.s32.totalorder %s110, %s112
      %p119 = scmp.eq.s32.totalorder %s18, 1
      %p120 = por %p118, %p119
      %p121 = scmp.ne.s32.totalorder %s112, %s113
      %p122 = scmp.eq.s32.totalorder %s18, 0
      %p123 = por %p121, %p122
      %p124 = scmp.ne.s32.totalorder %s112, %s113
      %p125 = scmp.eq.s32.totalorder %s19, 1
      %p126 = por %p124, %p125
      %p128 = scmp.ne.s32.totalorder %s113, %s127
      %p129 = scmp.eq.s32.totalorder %s19, 0
      %p130 = por %p128, %p129
      %s132 = sadd.s32 %s131, 1
      %p135 = scmp.eq.s32.totalorder %s13, 1
      %p136 = scmp.ne.s32.totalorder %s131, %s133
      %p137 = scmp.eq.s32.totalorder %s13, 0
      %p138 = por %p136, %p137
      %p139 = scmp.ne.s32.totalorder %s131, %s133
      %p140 = scmp.eq.s32.totalorder %s18, 1
      %p141 = por %p139, %p140
      %p142 = scmp.ne.s32.totalorder %s133, %s134
      %p143 = scmp.eq.s32.totalorder %s18, 0
      %p144 = por %p142, %p143
      %p145 = scmp.ne.s32.totalorder %s133, %s134
      %p146 = scmp.eq.s32.totalorder %s19, 1
      %p147 = por %p145, %p146
      %p149 = scmp.ne.s32.totalorder %s134, %s148
      %p150 = scmp.eq.s32.totalorder %s19, 0
      %p151 = por %p149, %p150
      %s153 = sadd.s32 %s152, 1
      %p156 = scmp.eq.s32.totalorder %s13, 1
      %p157 = scmp.ne.s32.totalorder %s152, %s154
      %p158 = scmp.eq.s32.totalorder %s13, 0
      %p159 = por %p157, %p158
      %p160 = scmp.ne.s32.totalorder %s152, %s154
      %p161 = scmp.eq.s32.totalorder %s18, 1
      %p162 = por %p160, %p161
      %p163 = scmp.ne.s32.totalorder %s154, %s155
      %p164 = scmp.eq.s32.totalorder %s18, 0
      %p165 = por %p163, %p164
      %p166 = scmp.ne.s32.totalorder %s154, %s155
      %p167 = scmp.eq.s32.totalorder %s19, 1
      %p168 = por %p166, %p167
      %p170 = scmp.ne.s32.totalorder %s155, %s169
      %p171 = scmp.eq.s32.totalorder %s19, 0
      %p172 = por %p170, %p171
      %s173 = ssub.s32 %s13, %s20
      %p174 = scmp.eq.s32.totalorder %s173, 0
      %s176 = sadd.s32 %s175, 1
      %s177 = scalar_select %p174, %s175, %s176
      %p180 = pneg %p174
      %p181 = scmp.eq.s32.totalorder %s13, 1
      %p182 = por %p180, %p181
      %p183 = scmp.ne.s32.totalorder %s175, %s178
      %p184 = scmp.eq.s32.totalorder %s13, 0
      %p185 = por %p183, %p184
      %p186 = scmp.ne.s32.totalorder %s175, %s178
      %p187 = scmp.eq.s32.totalorder %s18, 1
      %p188 = por %p186, %p187
      %p189 = scmp.ne.s32.totalorder %s178, %s179
      %p190 = scmp.eq.s32.totalorder %s18, 0
      %p191 = por %p189, %p190
      %p192 = scmp.ne.s32.totalorder %s178, %s179
      %p193 = scmp.eq.s32.totalorder %s19, 1
      %p194 = por %p192, %p193
      %p196 = scmp.ne.s32.totalorder %s179, %s195
      %p197 = scmp.eq.s32.totalorder %s19, 0
      %p198 = por %p196, %p197
      %p199 = scmp.le.s32.totalorder 1, %s13
      %p200 = scmp.lt.s32.totalorder %s13, 3
      %p201 = pnand %p199, %p200
      %p202 = pneg %p201
      // Predicated region
      $region9: #{tpu_custom_call.1} parent=5 // pred_check
        _
      $region10: #{tpu_custom_call.1} parent=5 // pred_check_branch
        %204 = sbr.rel (%p201) target = $region12
      $region11: #{tpu_custom_call.1} parent=5 // pred_region
        %s205 = ssub.s32 %s13, 1
        // Predicated region
        $region13: #{tpu_custom_call.1} parent=11 // pred_check
          %p206 = pneg %p60
        $region14: #{tpu_custom_call.1} parent=11 // pred_check_branch
          %208 = sbr.rel (%p206) target = $region16
        $region15: #{tpu_custom_call.1} parent=11 // pred_region
          _
        $region16: #{tpu_custom_call.1} parent=11 // pred_fallthru
          _
        // Predicated region
        $region17: #{tpu_custom_call.1} parent=11 // pred_check
          %p209 = pneg %p81
        $region18: #{tpu_custom_call.1} parent=11 // pred_check_branch
          %211 = sbr.rel (%p209) target = $region20
        $region19: #{tpu_custom_call.1} parent=11 // pred_region
          _
        $region20: #{tpu_custom_call.1} parent=11 // pred_fallthru
          _
        // Predicated region
        $region21: #{tpu_custom_call.1} parent=11 // pred_check
          %p212 = pneg %p102
        $region22: #{tpu_custom_call.1} parent=11 // pred_check_branch
          %214 = sbr.rel (%p212) target = $region24
        $region23: #{tpu_custom_call.1} parent=11 // pred_region
          _
        $region24: #{tpu_custom_call.1} parent=11 // pred_fallthru
          _
        // Predicated region
        $region25: #{tpu_custom_call.1} parent=11 // pred_check
          %p215 = pneg %p123
        $region26: #{tpu_custom_call.1} parent=11 // pred_check_branch
          %217 = sbr.rel (%p215) target = $region28
        $region27: #{tpu_custom_call.1} parent=11 // pred_region
          _
        $region28: #{tpu_custom_call.1} parent=11 // pred_fallthru
          _
        // Predicated region
        $region29: #{tpu_custom_call.1} parent=11 // pred_check
          %p218 = pneg %p144
        $region30: #{tpu_custom_call.1} parent=11 // pred_check_branch
          %220 = sbr.rel (%p218) target = $region32
        $region31: #{tpu_custom_call.1} parent=11 // pred_region
          _
        $region32: #{tpu_custom_call.1} parent=11 // pred_fallthru
          _
        // Predicated region
        $region33: #{tpu_custom_call.1} parent=11 // pred_check
          %p221 = pneg %p165
        $region34: #{tpu_custom_call.1} parent=11 // pred_check_branch
          %223 = sbr.rel (%p221) target = $region36
        $region35: #{tpu_custom_call.1} parent=11 // pred_region
          _
        $region36: #{tpu_custom_call.1} parent=11 // pred_fallthru
          _
      $region12: #{tpu_custom_call.1} parent=5 // pred_fallthru
        _
      %p224 = scmp.lt.s32.totalorder %s13, 2
      // Predicated region
      $region37: #{tpu_custom_call.1} parent=5 // pred_check
        %p225 = pneg %p224
      $region38: #{tpu_custom_call.1} parent=5 // pred_check_branch
        %227 = sbr.rel (%p225) target = $region40
      $region39: #{tpu_custom_call.1} parent=5 // pred_region
        // Predicated region
        $region41: #{tpu_custom_call.1} parent=39 // pred_check
          %p228 = pneg %p33
        $region42: #{tpu_custom_call.1} parent=39 // pred_check_branch
          %230 = sbr.rel (%p228) target = $region44
        $region43: #{tpu_custom_call.1} parent=39 // pred_region
          %s231 = smul.u32 32, %s13
          %s232 = ssub.s32 63, %s231
          %p233 = scmp.lt.s32.totalorder %s232, 32
          %s234 = scalar_select %p233, %s232, 32
          %s235 = smul.u32 8, %s234
          %p236 = scmp.lt.s32.totalorder %s231, 62
          %s237 = scalar_select %p236, %s231, 62
          %s238 = smul.addr %s237, 8
          %s239 = scalar_lea.vmem %s0, %s238
          %s240 = smul.u32 32, %s13
          %s241 = ssub.s32 63, %s240
          %p242 = scmp.lt.s32.totalorder %s241, 32
          %s243 = scalar_select %p242, %s241, 32
          %s244 = smul.u32 8, %s243
        $region44: #{tpu_custom_call.1} parent=39 // pred_fallthru
          _
      $region40: #{tpu_custom_call.1} parent=5 // pred_fallthru
        _
      %p245 = scmp.le.s32.totalorder 1, %s13
      %p246 = scmp.lt.s32.totalorder %s13, 3
      %p247 = pnand %p245, %p246
      %p248 = pneg %p247
      // Predicated region
      $region45: #{tpu_custom_call.1} parent=5 // pred_check
        _
      $region46: #{tpu_custom_call.1} parent=5 // pred_check_branch
        %250 = sbr.rel (%p247) target = $region48
      $region47: #{tpu_custom_call.1} parent=5 // pred_region
        %s251 = ssub.s32 %s13, 1
        %s252 = smul.u32 32, %s18
        %s253 = ssub.s32 63, %s252
        %p254 = scmp.lt.s32.totalorder %s253, 32
        %s255 = scalar_select %p254, %s253, 32
        %s256 = smul.u32 8, %s255
        %p257 = scmp.lt.s32.totalorder %s252, 62
        %s258 = scalar_select %p257, %s252, 62
        %s259 = smul.addr %s258, 8
        %s260 = scalar_lea.vmem %s0, %s259
        %p261 = pneg %p39
        %p262 = pneg %p36
        %p263 = pneg %p60
        %p264 = pneg %p57
        %p265 = pneg %p81
        %p266 = pneg %p78
        %p267 = pneg %p102
        %p268 = pneg %p99
        %p269 = pneg %p123
        %p270 = pneg %p120
        %p271 = pneg %p144
        %p272 = pneg %p141
        %p273 = pneg %p165
        %p274 = pneg %p162
        %p275 = pneg %p191
        %p276 = pneg %p188
        %s277 = sand.u32 %s178, 1
        %s278 = sand.u32 %s178, 1
        %s279 = smul.addr %s278, 256
        %s280 = scalar_lea.vmem [#allocation2], %s279
        %s281 = smul.u32 32, %s18
        %s282 = ssub.s32 63, %s281
        %p283 = scmp.lt.s32.totalorder %s282, 32
        %s284 = scalar_select %p283, %s282, 32
        %s285 = smul.u32 8, %s284
        %p286 = scmp.lt.s32.totalorder %s281, 62
        %s287 = scalar_select %p286, %s281, 62
        %s288 = smul.addr %s287, 8
        %s289 = scalar_lea.vmem %s0, %s288
        %s290 = smul.u32 32, %s18
        %s291 = ssub.s32 63, %s290
        %p292 = scmp.lt.s32.totalorder %s291, 32
        %s293 = scalar_select %p292, %s291, 32
        %s294 = smul.u32 8, %s293
        %s295 = smul.u32 32, %s18
        %s296 = ssub.s32 63, %s295
        %p297 = scmp.lt.s32.totalorder %s296, 32
        %s298 = scalar_select %p297, %s296, 32
        %s299 = smul.u32 8, %s298
        %v300 = vld [vmem:[%s289] sm:$0xff]
        %v301 = vld [vmem:[%s289 + $0x8] sm:$0xff]
        %v302 = vld [vmem:[%s289 + $0x10] sm:$0xff]
        %v303 = vld [vmem:[%s289 + $0x18] sm:$0xff]
        %v304 = vld [vmem:[%s289 + $0x20] sm:$0xff]
        %v305 = vld [vmem:[%s289 + $0x28] sm:$0xff]
        %v306 = vld [vmem:[%s289 + $0x30] sm:$0xff]
        %v307 = vld [vmem:[%s289 + $0x38] sm:$0xff]
        %v308 = vld [vmem:[%s289 + $0x40] sm:$0xff]
        %v309 = vld [vmem:[%s289 + $0x48] sm:$0xff]
        %v310 = vld [vmem:[%s289 + $0x50] sm:$0xff]
        %v311 = vld [vmem:[%s289 + $0x58] sm:$0xff]
        %v312 = vld [vmem:[%s289 + $0x60] sm:$0xff]
        %v313 = vld [vmem:[%s289 + $0x68] sm:$0xff]
        %v314 = vld [vmem:[%s289 + $0x70] sm:$0xff]
        %v315 = vld [vmem:[%s289 + $0x78] sm:$0xff]
        %v316 = vld [vmem:[%s289 + $0x80] sm:$0xff]
        %v317 = vld [vmem:[%s289 + $0x88] sm:$0xff]
        %v318 = vld [vmem:[%s289 + $0x90] sm:$0xff]
        %v319 = vld [vmem:[%s289 + $0x98] sm:$0xff]
        %v320 = vld [vmem:[%s289 + $0xa0] sm:$0xff]
        %v321 = vld [vmem:[%s289 + $0xa8] sm:$0xff]
        %v322 = vld [vmem:[%s289 + $0xb0] sm:$0xff]
        %v323 = vld [vmem:[%s289 + $0xb8] sm:$0xff]
        %v324 = vld [vmem:[%s289 + $0xc0] sm:$0xff]
        %v325 = vld [vmem:[%s289 + $0xc8] sm:$0xff]
        %v326 = vld [vmem:[%s289 + $0xd0] sm:$0xff]
        %v327 = vld [vmem:[%s289 + $0xd8] sm:$0xff]
        %v328 = vld [vmem:[%s289 + $0xe0] sm:$0xff]
        %v329 = vld [vmem:[%s289 + $0xe8] sm:$0xff]
        %v330 = vld [vmem:[%s289 + $0xf0] sm:$0xff]
        %v331 = vld [vmem:[%s289 + $0xf8] sm:$0xff]
        %v332 = vld [vmem:[%s1] sm:$0xff]
        %v333 = vld [vmem:[%s1 + $0x8] sm:$0xff]
        %v334 = vld [vmem:[%s2] sm:$0x1]
        %v336 = vperm.slane %v334, 0
        %vm338 = vcmask 130048
        %v340 = vsel %vm338, %v300, 0
        %v343 = vsel %vm338, %v301, 0
        %v346 = vsel %vm338, %v302, 0
        %v349 = vsel %vm338, %v303, 0
        %v352 = vsel %vm338, %v304, 0
        %v355 = vsel %vm338, %v305, 0
        %v358 = vsel %vm338, %v306, 0
        %v361 = vsel %vm338, %v307, 0
        %v364 = vsel %vm338, %v308, 0
        %v367 = vsel %vm338, %v309, 0
        %v370 = vsel %vm338, %v310, 0
        %v373 = vsel %vm338, %v311, 0
        %v376 = vsel %vm338, %v312, 0
        %v379 = vsel %vm338, %v313, 0
        %v382 = vsel %vm338, %v314, 0
        %v385 = vsel %vm338, %v315, 0
        %v388 = vsel %vm338, %v316, 0
        %v391 = vsel %vm338, %v317, 0
        %v394 = vsel %vm338, %v318, 0
        %v397 = vsel %vm338, %v319, 0
        %v400 = vsel %vm338, %v320, 0
        %v403 = vsel %vm338, %v321, 0
        %v406 = vsel %vm338, %v322, 0
        %v409 = vsel %vm338, %v323, 0
        %v412 = vsel %vm338, %v324, 0
        %v415 = vsel %vm338, %v325, 0
        %v418 = vsel %vm338, %v326, 0
        %v421 = vsel %vm338, %v327, 0
        %v424 = vsel %vm338, %v328, 0
        %v427 = vsel %vm338, %v329, 0
        %v430 = vsel %vm338, %v330, 0
        %v433 = vsel %vm338, %v331, 0
        %435 = vmatpush.msra.mxu0 0.0
        %436 = vmatpush.msra.mxu0 0.0
        %437 = vmatpush.msra.mxu0 0.0
        %438 = vmatpush.msra.mxu0 0.0
        %439 = vmatpush.msra.mxu0 0.0
        %440 = vmatpush.msra.mxu0 0.0
        %441 = vmatpush.msra.mxu0 0.0
        %442 = vmatpush.msra.mxu0 0.0
        %443 = vmatpush.msra.mxu0 0.0
        %444 = vmatpush.msra.mxu0 0.0
        %445 = vmatpush.msra.mxu0 0.0
        %446 = vmatpush.msra.mxu0 0.0
        %447 = vmatpush.msra.mxu0 0.0
        %448 = vmatpush.msra.mxu0 0.0
        %449 = vmatpush.msra.mxu0 %v333
        %450 = vmatpush.msra.mxu0 %v332
        %451 = vmatmul.f32.gmra.mxu0 %v340
        %v452 = vpop.f32.mrf.mxu0
        %v453 = vadd.f32 %v336, %v452
        %454 = vmatmul.f32.gmra.mxu0 %v343
        %v455 = vpop.f32.mrf.mxu0
        %v456 = vadd.f32 %v336, %v455
        %457 = vmatmul.f32.gmra.mxu0 %v346
        %v458 = vpop.f32.mrf.mxu0
        %v459 = vadd.f32 %v336, %v458
        %460 = vmatmul.f32.gmra.mxu0 %v349
        %v461 = vpop.f32.mrf.mxu0
        %v462 = vadd.f32 %v336, %v461
        %463 = vmatmul.f32.gmra.mxu0 %v352
        %v464 = vpop.f32.mrf.mxu0
        %v465 = vadd.f32 %v336, %v464
        %466 = vmatmul.f32.gmra.mxu0 %v355
        %v467 = vpop.f32.mrf.mxu0
        %v468 = vadd.f32 %v336, %v467
        %469 = vmatmul.f32.gmra.mxu0 %v358
        %v470 = vpop.f32.mrf.mxu0
        %v471 = vadd.f32 %v336, %v470
        %472 = vmatmul.f32.gmra.mxu0 %v361
        %v473 = vpop.f32.mrf.mxu0
        %v474 = vadd.f32 %v336, %v473
        %475 = vmatmul.f32.gmra.mxu0 %v364
        %v476 = vpop.f32.mrf.mxu0
        %v477 = vadd.f32 %v336, %v476
        %478 = vmatmul.f32.gmra.mxu0 %v367
        %v479 = vpop.f32.mrf.mxu0
        %v480 = vadd.f32 %v336, %v479
        %481 = vmatmul.f32.gmra.mxu0 %v370
        %v482 = vpop.f32.mrf.mxu0
        %v483 = vadd.f32 %v336, %v482
        %484 = vmatmul.f32.gmra.mxu0 %v373
        %v485 = vpop.f32.mrf.mxu0
        %v486 = vadd.f32 %v336, %v485
        %487 = vmatmul.f32.gmra.mxu0 %v376
        %v488 = vpop.f32.mrf.mxu0
        %v489 = vadd.f32 %v336, %v488
        %490 = vmatmul.f32.gmra.mxu0 %v379
        %v491 = vpop.f32.mrf.mxu0
        %v492 = vadd.f32 %v336, %v491
        %493 = vmatmul.f32.gmra.mxu0 %v382
        %v494 = vpop.f32.mrf.mxu0
        %v495 = vadd.f32 %v336, %v494
        %496 = vmatmul.f32.gmra.mxu0 %v385
        %v497 = vpop.f32.mrf.mxu0
        %v498 = vadd.f32 %v336, %v497
        %499 = vmatmul.f32.gmra.mxu0 %v388
        %v500 = vpop.f32.mrf.mxu0
        %v501 = vadd.f32 %v336, %v500
        %502 = vmatmul.f32.gmra.mxu0 %v391
        %v503 = vpop.f32.mrf.mxu0
        %v504 = vadd.f32 %v336, %v503
        %505 = vmatmul.f32.gmra.mxu0 %v394
        %v506 = vpop.f32.mrf.mxu0
        %v507 = vadd.f32 %v336, %v506
        %508 = vmatmul.f32.gmra.mxu0 %v397
        %v509 = vpop.f32.mrf.mxu0
        %v510 = vadd.f32 %v336, %v509
        %511 = vmatmul.f32.gmra.mxu0 %v400
        %v512 = vpop.f32.mrf.mxu0
        %v513 = vadd.f32 %v336, %v512
        %514 = vmatmul.f32.gmra.mxu0 %v403
        %v515 = vpop.f32.mrf.mxu0
        %v516 = vadd.f32 %v336, %v515
        %517 = vmatmul.f32.gmra.mxu0 %v406
        %v518 = vpop.f32.mrf.mxu0
        %v519 = vadd.f32 %v336, %v518
        %520 = vmatmul.f32.gmra.mxu0 %v409
        %v521 = vpop.f32.mrf.mxu0
        %v522 = vadd.f32 %v336, %v521
        %523 = vmatmul.f32.gmra.mxu0 %v412
        %v524 = vpop.f32.mrf.mxu0
        %v525 = vadd.f32 %v336, %v524
        %526 = vmatmul.f32.gmra.mxu0 %v415
        %v527 = vpop.f32.mrf.mxu0
        %v528 = vadd.f32 %v336, %v527
        %529 = vmatmul.f32.gmra.mxu0 %v418
        %v530 = vpop.f32.mrf.mxu0
        %v531 = vadd.f32 %v336, %v530
        %532 = vmatmul.f32.gmra.mxu0 %v421
        %v533 = vpop.f32.mrf.mxu0
        %v534 = vadd.f32 %v336, %v533
        %535 = vmatmul.f32.gmra.mxu0 %v424
        %v536 = vpop.f32.mrf.mxu0
        %v537 = vadd.f32 %v336, %v536
        %538 = vmatmul.f32.gmra.mxu0 %v427
        %v539 = vpop.f32.mrf.mxu0
        %v540 = vadd.f32 %v336, %v539
        %541 = vmatmul.f32.gmra.mxu0 %v430
        %v542 = vpop.f32.mrf.mxu0
        %v543 = vadd.f32 %v336, %v542
        %544 = vmatmul.f32.gmra.mxu0 %v433
        %v545 = vpop.f32.mrf.mxu0
        %v546 = vadd.f32 %v336, %v545
        %547 = vdwg.mxu0
        %v548 = vxor.u32 %v453, 2147483648
        %v549 = vxor.u32 %v456, 2147483648
        %v550 = vxor.u32 %v459, 2147483648
        %v551 = vxor.u32 %v462, 2147483648
        %v552 = vxor.u32 %v465, 2147483648
        %v553 = vxor.u32 %v468, 2147483648
        %v554 = vxor.u32 %v471, 2147483648
        %v555 = vxor.u32 %v474, 2147483648
        %v556 = vxor.u32 %v477, 2147483648
        %v557 = vxor.u32 %v480, 2147483648
        %v558 = vxor.u32 %v483, 2147483648
        %v559 = vxor.u32 %v486, 2147483648
        %v560 = vxor.u32 %v489, 2147483648
        %v561 = vxor.u32 %v492, 2147483648
        %v562 = vxor.u32 %v495, 2147483648
        %v563 = vxor.u32 %v498, 2147483648
        %v564 = vxor.u32 %v501, 2147483648
        %v565 = vxor.u32 %v504, 2147483648
        %v566 = vxor.u32 %v507, 2147483648
        %v567 = vxor.u32 %v510, 2147483648
        %v568 = vxor.u32 %v513, 2147483648
        %v569 = vxor.u32 %v516, 2147483648
        %v570 = vxor.u32 %v519, 2147483648
        %v571 = vxor.u32 %v522, 2147483648
        %v572 = vxor.u32 %v525, 2147483648
        %v573 = vxor.u32 %v528, 2147483648
        %v574 = vxor.u32 %v531, 2147483648
        %v575 = vxor.u32 %v534, 2147483648
        %v576 = vxor.u32 %v537, 2147483648
        %v577 = vxor.u32 %v540, 2147483648
        %v578 = vxor.u32 %v543, 2147483648
        %v579 = vxor.u32 %v546, 2147483648
        %v580 = vmul.f32 %v548, 1.442695
        %v581 = vpow.pop %v580
        %v582 = vmul.f32 %v549, 1.442695
        %v583 = vpow.pop %v582
        %v584 = vmul.f32 %v550, 1.442695
        %v585 = vpow.pop %v584
        %v586 = vmul.f32 %v551, 1.442695
        %v587 = vpow.pop %v586
        %v588 = vmul.f32 %v552, 1.442695
        %v589 = vpow.pop %v588
        %v590 = vmul.f32 %v553, 1.442695
        %v591 = vpow.pop %v590
        %v592 = vmul.f32 %v554, 1.442695
        %v593 = vpow.pop %v592
        %v594 = vmul.f32 %v555, 1.442695
        %v595 = vpow.pop %v594
        %v596 = vmul.f32 %v556, 1.442695
        %v597 = vpow.pop %v596
        %v598 = vmul.f32 %v557, 1.442695
        %v599 = vpow.pop %v598
        %v600 = vmul.f32 %v558, 1.442695
        %v601 = vpow.pop %v600
        %v602 = vmul.f32 %v559, 1.442695
        %v603 = vpow.pop %v602
        %v604 = vmul.f32 %v560, 1.442695
        %v605 = vpow.pop %v604
        %v606 = vmul.f32 %v561, 1.442695
        %v607 = vpow.pop %v606
        %v608 = vmul.f32 %v562, 1.442695
        %v609 = vpow.pop %v608
        %v610 = vmul.f32 %v563, 1.442695
        %v611 = vpow.pop %v610
        %v612 = vmul.f32 %v564, 1.442695
        %v613 = vpow.pop %v612
        %v614 = vmul.f32 %v565, 1.442695
        %v615 = vpow.pop %v614
        %v616 = vmul.f32 %v566, 1.442695
        %v617 = vpow.pop %v616
        %v618 = vmul.f32 %v567, 1.442695
        %v619 = vpow.pop %v618
        %v620 = vmul.f32 %v568, 1.442695
        %v621 = vpow.pop %v620
        %v622 = vmul.f32 %v569, 1.442695
        %v623 = vpow.pop %v622
        %v624 = vmul.f32 %v570, 1.442695
        %v625 = vpow.pop %v624
        %v626 = vmul.f32 %v571, 1.442695
        %v627 = vpow.pop %v626
        %v628 = vmul.f32 %v572, 1.442695
        %v629 = vpow.pop %v628
        %v630 = vmul.f32 %v573, 1.442695
        %v631 = vpow.pop %v630
        %v632 = vmul.f32 %v574, 1.442695
        %v633 = vpow.pop %v632
        %v634 = vmul.f32 %v575, 1.442695
        %v635 = vpow.pop %v634
        %v636 = vmul.f32 %v576, 1.442695
        %v637 = vpow.pop %v636
        %v638 = vmul.f32 %v577, 1.442695
        %v639 = vpow.pop %v638
        %v640 = vmul.f32 %v578, 1.442695
        %v641 = vpow.pop %v640
        %v642 = vmul.f32 %v579, 1.442695
        %v643 = vpow.pop %v642
        %v644 = vadd.f32 %v581, 1.0
        %v645 = vadd.f32 %v583, 1.0
        %v646 = vadd.f32 %v585, 1.0
        %v647 = vadd.f32 %v587, 1.0
        %v648 = vadd.f32 %v589, 1.0
        %v649 = vadd.f32 %v591, 1.0
        %v650 = vadd.f32 %v593, 1.0
        %v651 = vadd.f32 %v595, 1.0
        %v652 = vadd.f32 %v597, 1.0
        %v653 = vadd.f32 %v599, 1.0
        %v654 = vadd.f32 %v601, 1.0
        %v655 = vadd.f32 %v603, 1.0
        %v656 = vadd.f32 %v605, 1.0
        %v657 = vadd.f32 %v607, 1.0
        %v658 = vadd.f32 %v609, 1.0
        %v659 = vadd.f32 %v611, 1.0
        %v660 = vadd.f32 %v613, 1.0
        %v661 = vadd.f32 %v615, 1.0
        %v662 = vadd.f32 %v617, 1.0
        %v663 = vadd.f32 %v619, 1.0
        %v664 = vadd.f32 %v621, 1.0
        %v665 = vadd.f32 %v623, 1.0
        %v666 = vadd.f32 %v625, 1.0
        %v667 = vadd.f32 %v627, 1.0
        %v668 = vadd.f32 %v629, 1.0
        %v669 = vadd.f32 %v631, 1.0
        %v670 = vadd.f32 %v633, 1.0
        %v671 = vadd.f32 %v635, 1.0
        %v672 = vadd.f32 %v637, 1.0
        %v673 = vadd.f32 %v639, 1.0
        %v674 = vadd.f32 %v641, 1.0
        %v675 = vadd.f32 %v643, 1.0
        %v676 = vrcp.pop %v644
        %v677 = vmul.f32 %v644, %v676
        %v678 = vsub.f32 1.0, %v677
        %v679 = vmul.f32 %v676, %v678
        %v680 = vadd.f32 %v676, %v679
        %vm681 = vweird.f32 %v644
        %vm682 = vweird.f32 %v676
        %vm683 = vmor %vm681, %vm682
        %v684 = vsel %vm683, %v676, %v680
        %v685 = vand.u32 2147483647, %v644
        %vm686 = vcmp.eq.f32.partialorder %v685, 8.507059e+37
        %v687 = vand.u32 %v644, 2147483648
        %v688 = vor.u32 1.1754944e-38, %v687
        %v689 = vsel %vm686, %v688, %v684
        %v690 = vmul.f32 1.0, %v689
        %v691 = vrcp.pop %v645
        %v692 = vmul.f32 %v645, %v691
        %v693 = vsub.f32 1.0, %v692
        %v694 = vmul.f32 %v691, %v693
        %v695 = vadd.f32 %v691, %v694
        %vm696 = vweird.f32 %v645
        %vm697 = vweird.f32 %v691
        %vm698 = vmor %vm696, %vm697
        %v699 = vsel %vm698, %v691, %v695
        %v700 = vand.u32 2147483647, %v645
        %vm701 = vcmp.eq.f32.partialorder %v700, 8.507059e+37
        %v702 = vand.u32 %v645, 2147483648
        %v703 = vor.u32 1.1754944e-38, %v702
        %v704 = vsel %vm701, %v703, %v699
        %v705 = vmul.f32 1.0, %v704
        %v706 = vrcp.pop %v646
        %v707 = vmul.f32 %v646, %v706
        %v708 = vsub.f32 1.0, %v707
        %v709 = vmul.f32 %v706, %v708
        %v710 = vadd.f32 %v706, %v709
        %vm711 = vweird.f32 %v646
        %vm712 = vweird.f32 %v706
        %vm713 = vmor %vm711, %vm712
        %v714 = vsel %vm713, %v706, %v710
        %v715 = vand.u32 2147483647, %v646
        %vm716 = vcmp.eq.f32.partialorder %v715, 8.507059e+37
        %v717 = vand.u32 %v646, 2147483648
        %v718 = vor.u32 1.1754944e-38, %v717
        %v719 = vsel %vm716, %v718, %v714
        %v720 = vmul.f32 1.0, %v719
        %v721 = vrcp.pop %v647
        %v722 = vmul.f32 %v647, %v721
        %v723 = vsub.f32 1.0, %v722
        %v724 = vmul.f32 %v721, %v723
        %v725 = vadd.f32 %v721, %v724
        %vm726 = vweird.f32 %v647
        %vm727 = vweird.f32 %v721
        %vm728 = vmor %vm726, %vm727
        %v729 = vsel %vm728, %v721, %v725
        %v730 = vand.u32 2147483647, %v647
        %vm731 = vcmp.eq.f32.partialorder %v730, 8.507059e+37
        %v732 = vand.u32 %v647, 2147483648
        %v733 = vor.u32 1.1754944e-38, %v732
        %v734 = vsel %vm731, %v733, %v729
        %v735 = vmul.f32 1.0, %v734
        %v736 = vrcp.pop %v648
        %v737 = vmul.f32 %v648, %v736
        %v738 = vsub.f32 1.0, %v737
        %v739 = vmul.f32 %v736, %v738
        %v740 = vadd.f32 %v736, %v739
        %vm741 = vweird.f32 %v648
        %vm742 = vweird.f32 %v736
        %vm743 = vmor %vm741, %vm742
        %v744 = vsel %vm743, %v736, %v740
        %v745 = vand.u32 2147483647, %v648
        %vm746 = vcmp.eq.f32.partialorder %v745, 8.507059e+37
        %v747 = vand.u32 %v648, 2147483648
        %v748 = vor.u32 1.1754944e-38, %v747
        %v749 = vsel %vm746, %v748, %v744
        %v750 = vmul.f32 1.0, %v749
        %v751 = vrcp.pop %v649
        %v752 = vmul.f32 %v649, %v751
        %v753 = vsub.f32 1.0, %v752
        %v754 = vmul.f32 %v751, %v753
        %v755 = vadd.f32 %v751, %v754
        %vm756 = vweird.f32 %v649
        %vm757 = vweird.f32 %v751
        %vm758 = vmor %vm756, %vm757
        %v759 = vsel %vm758, %v751, %v755
        %v760 = vand.u32 2147483647, %v649
        %vm761 = vcmp.eq.f32.partialorder %v760, 8.507059e+37
        %v762 = vand.u32 %v649, 2147483648
        %v763 = vor.u32 1.1754944e-38, %v762
        %v764 = vsel %vm761, %v763, %v759
        %v765 = vmul.f32 1.0, %v764
        %v766 = vrcp.pop %v650
        %v767 = vmul.f32 %v650, %v766
        %v768 = vsub.f32 1.0, %v767
        %v769 = vmul.f32 %v766, %v768
        %v770 = vadd.f32 %v766, %v769
        %vm771 = vweird.f32 %v650
        %vm772 = vweird.f32 %v766
        %vm773 = vmor %vm771, %vm772
        %v774 = vsel %vm773, %v766, %v770
        %v775 = vand.u32 2147483647, %v650
        %vm776 = vcmp.eq.f32.partialorder %v775, 8.507059e+37
        %v777 = vand.u32 %v650, 2147483648
        %v778 = vor.u32 1.1754944e-38, %v777
        %v779 = vsel %vm776, %v778, %v774
        %v780 = vmul.f32 1.0, %v779
        %v781 = vrcp.pop %v651
        %v782 = vmul.f32 %v651, %v781
        %v783 = vsub.f32 1.0, %v782
        %v784 = vmul.f32 %v781, %v783
        %v785 = vadd.f32 %v781, %v784
        %vm786 = vweird.f32 %v651
        %vm787 = vweird.f32 %v781
        %vm788 = vmor %vm786, %vm787
        %v789 = vsel %vm788, %v781, %v785
        %v790 = vand.u32 2147483647, %v651
        %vm791 = vcmp.eq.f32.partialorder %v790, 8.507059e+37
        %v792 = vand.u32 %v651, 2147483648
        %v793 = vor.u32 1.1754944e-38, %v792
        %v794 = vsel %vm791, %v793, %v789
        %v795 = vmul.f32 1.0, %v794
        %v796 = vrcp.pop %v652
        %v797 = vmul.f32 %v652, %v796
        %v798 = vsub.f32 1.0, %v797
        %v799 = vmul.f32 %v796, %v798
        %v800 = vadd.f32 %v796, %v799
        %vm801 = vweird.f32 %v652
        %vm802 = vweird.f32 %v796
        %vm803 = vmor %vm801, %vm802
        %v804 = vsel %vm803, %v796, %v800
        %v805 = vand.u32 2147483647, %v652
        %vm806 = vcmp.eq.f32.partialorder %v805, 8.507059e+37
        %v807 = vand.u32 %v652, 2147483648
        %v808 = vor.u32 1.1754944e-38, %v807
        %v809 = vsel %vm806, %v808, %v804
        %v810 = vmul.f32 1.0, %v809
        %v811 = vrcp.pop %v653
        %v812 = vmul.f32 %v653, %v811
        %v813 = vsub.f32 1.0, %v812
        %v814 = vmul.f32 %v811, %v813
        %v815 = vadd.f32 %v811, %v814
        %vm816 = vweird.f32 %v653
        %vm817 = vweird.f32 %v811
        %vm818 = vmor %vm816, %vm817
        %v819 = vsel %vm818, %v811, %v815
        %v820 = vand.u32 2147483647, %v653
        %vm821 = vcmp.eq.f32.partialorder %v820, 8.507059e+37
        %v822 = vand.u32 %v653, 2147483648
        %v823 = vor.u32 1.1754944e-38, %v822
        %v824 = vsel %vm821, %v823, %v819
        %v825 = vmul.f32 1.0, %v824
        %v826 = vrcp.pop %v654
        %v827 = vmul.f32 %v654, %v826
        %v828 = vsub.f32 1.0, %v827
        %v829 = vmul.f32 %v826, %v828
        %v830 = vadd.f32 %v826, %v829
        %vm831 = vweird.f32 %v654
        %vm832 = vweird.f32 %v826
        %vm833 = vmor %vm831, %vm832
        %v834 = vsel %vm833, %v826, %v830
        %v835 = vand.u32 2147483647, %v654
        %vm836 = vcmp.eq.f32.partialorder %v835, 8.507059e+37
        %v837 = vand.u32 %v654, 2147483648
        %v838 = vor.u32 1.1754944e-38, %v837
        %v839 = vsel %vm836, %v838, %v834
        %v840 = vmul.f32 1.0, %v839
        %v841 = vrcp.pop %v655
        %v842 = vmul.f32 %v655, %v841
        %v843 = vsub.f32 1.0, %v842
        %v844 = vmul.f32 %v841, %v843
        %v845 = vadd.f32 %v841, %v844
        %vm846 = vweird.f32 %v655
        %vm847 = vweird.f32 %v841
        %vm848 = vmor %vm846, %vm847
        %v849 = vsel %vm848, %v841, %v845
        %v850 = vand.u32 2147483647, %v655
        %vm851 = vcmp.eq.f32.partialorder %v850, 8.507059e+37
        %v852 = vand.u32 %v655, 2147483648
        %v853 = vor.u32 1.1754944e-38, %v852
        %v854 = vsel %vm851, %v853, %v849
        %v855 = vmul.f32 1.0, %v854
        %v856 = vrcp.pop %v656
        %v857 = vmul.f32 %v656, %v856
        %v858 = vsub.f32 1.0, %v857
        %v859 = vmul.f32 %v856, %v858
        %v860 = vadd.f32 %v856, %v859
        %vm861 = vweird.f32 %v656
        %vm862 = vweird.f32 %v856
        %vm863 = vmor %vm861, %vm862
        %v864 = vsel %vm863, %v856, %v860
        %v865 = vand.u32 2147483647, %v656
        %vm866 = vcmp.eq.f32.partialorder %v865, 8.507059e+37
        %v867 = vand.u32 %v656, 2147483648
        %v868 = vor.u32 1.1754944e-38, %v867
        %v869 = vsel %vm866, %v868, %v864
        %v870 = vmul.f32 1.0, %v869
        %v871 = vrcp.pop %v657
        %v872 = vmul.f32 %v657, %v871
        %v873 = vsub.f32 1.0, %v872
        %v874 = vmul.f32 %v871, %v873
        %v875 = vadd.f32 %v871, %v874
        %vm876 = vweird.f32 %v657
        %vm877 = vweird.f32 %v871
        %vm878 = vmor %vm876, %vm877
        %v879 = vsel %vm878, %v871, %v875
        %v880 = vand.u32 2147483647, %v657
        %vm881 = vcmp.eq.f32.partialorder %v880, 8.507059e+37
        %v882 = vand.u32 %v657, 2147483648
        %v883 = vor.u32 1.1754944e-38, %v882
        %v884 = vsel %vm881, %v883, %v879
        %v885 = vmul.f32 1.0, %v884
        %v886 = vrcp.pop %v658
        %v887 = vmul.f32 %v658, %v886
        %v888 = vsub.f32 1.0, %v887
        %v889 = vmul.f32 %v886, %v888
        %v890 = vadd.f32 %v886, %v889
        %vm891 = vweird.f32 %v658
        %vm892 = vweird.f32 %v886
        %vm893 = vmor %vm891, %vm892
        %v894 = vsel %vm893, %v886, %v890
        %v895 = vand.u32 2147483647, %v658
        %vm896 = vcmp.eq.f32.partialorder %v895, 8.507059e+37
        %v897 = vand.u32 %v658, 2147483648
        %v898 = vor.u32 1.1754944e-38, %v897
        %v899 = vsel %vm896, %v898, %v894
        %v900 = vmul.f32 1.0, %v899
        %v901 = vrcp.pop %v659
        %v902 = vmul.f32 %v659, %v901
        %v903 = vsub.f32 1.0, %v902
        %v904 = vmul.f32 %v901, %v903
        %v905 = vadd.f32 %v901, %v904
        %vm906 = vweird.f32 %v659
        %vm907 = vweird.f32 %v901
        %vm908 = vmor %vm906, %vm907
        %v909 = vsel %vm908, %v901, %v905
        %v910 = vand.u32 2147483647, %v659
        %vm911 = vcmp.eq.f32.partialorder %v910, 8.507059e+37
        %v912 = vand.u32 %v659, 2147483648
        %v913 = vor.u32 1.1754944e-38, %v912
        %v914 = vsel %vm911, %v913, %v909
        %v915 = vmul.f32 1.0, %v914
        %v916 = vrcp.pop %v660
        %v917 = vmul.f32 %v660, %v916
        %v918 = vsub.f32 1.0, %v917
        %v919 = vmul.f32 %v916, %v918
        %v920 = vadd.f32 %v916, %v919
        %vm921 = vweird.f32 %v660
        %vm922 = vweird.f32 %v916
        %vm923 = vmor %vm921, %vm922
        %v924 = vsel %vm923, %v916, %v920
        %v925 = vand.u32 2147483647, %v660
        %vm926 = vcmp.eq.f32.partialorder %v925, 8.507059e+37
        %v927 = vand.u32 %v660, 2147483648
        %v928 = vor.u32 1.1754944e-38, %v927
        %v929 = vsel %vm926, %v928, %v924
        %v930 = vmul.f32 1.0, %v929
        %v931 = vrcp.pop %v661
        %v932 = vmul.f32 %v661, %v931
        %v933 = vsub.f32 1.0, %v932
        %v934 = vmul.f32 %v931, %v933
        %v935 = vadd.f32 %v931, %v934
        %vm936 = vweird.f32 %v661
        %vm937 = vweird.f32 %v931
        %vm938 = vmor %vm936, %vm937
        %v939 = vsel %vm938, %v931, %v935
        %v940 = vand.u32 2147483647, %v661
        %vm941 = vcmp.eq.f32.partialorder %v940, 8.507059e+37
        %v942 = vand.u32 %v661, 2147483648
        %v943 = vor.u32 1.1754944e-38, %v942
        %v944 = vsel %vm941, %v943, %v939
        %v945 = vmul.f32 1.0, %v944
        %v946 = vrcp.pop %v662
        %v947 = vmul.f32 %v662, %v946
        %v948 = vsub.f32 1.0, %v947
        %v949 = vmul.f32 %v946, %v948
        %v950 = vadd.f32 %v946, %v949
        %vm951 = vweird.f32 %v662
        %vm952 = vweird.f32 %v946
        %vm953 = vmor %vm951, %vm952
        %v954 = vsel %vm953, %v946, %v950
        %v955 = vand.u32 2147483647, %v662
        %vm956 = vcmp.eq.f32.partialorder %v955, 8.507059e+37
        %v957 = vand.u32 %v662, 2147483648
        %v958 = vor.u32 1.1754944e-38, %v957
        %v959 = vsel %vm956, %v958, %v954
        %v960 = vmul.f32 1.0, %v959
        %v961 = vrcp.pop %v663
        %v962 = vmul.f32 %v663, %v961
        %v963 = vsub.f32 1.0, %v962
        %v964 = vmul.f32 %v961, %v963
        %v965 = vadd.f32 %v961, %v964
        %vm966 = vweird.f32 %v663
        %vm967 = vweird.f32 %v961
        %vm968 = vmor %vm966, %vm967
        %v969 = vsel %vm968, %v961, %v965
        %v970 = vand.u32 2147483647, %v663
        %vm971 = vcmp.eq.f32.partialorder %v970, 8.507059e+37
        %v972 = vand.u32 %v663, 2147483648
        %v973 = vor.u32 1.1754944e-38, %v972
        %v974 = vsel %vm971, %v973, %v969
        %v975 = vmul.f32 1.0, %v974
        %v976 = vrcp.pop %v664
        %v977 = vmul.f32 %v664, %v976
        %v978 = vsub.f32 1.0, %v977
        %v979 = vmul.f32 %v976, %v978
        %v980 = vadd.f32 %v976, %v979
        %vm981 = vweird.f32 %v664
        %vm982 = vweird.f32 %v976
        %vm983 = vmor %vm981, %vm982
        %v984 = vsel %vm983, %v976, %v980
        %v985 = vand.u32 2147483647, %v664
        %vm986 = vcmp.eq.f32.partialorder %v985, 8.507059e+37
        %v987 = vand.u32 %v664, 2147483648
        %v988 = vor.u32 1.1754944e-38, %v987
        %v989 = vsel %vm986, %v988, %v984
        %v990 = vmul.f32 1.0, %v989
        %v991 = vrcp.pop %v665
        %v992 = vmul.f32 %v665, %v991
        %v993 = vsub.f32 1.0, %v992
        %v994 = vmul.f32 %v991, %v993
        %v995 = vadd.f32 %v991, %v994
        %vm996 = vweird.f32 %v665
        %vm997 = vweird.f32 %v991
        %vm998 = vmor %vm996, %vm997
        %v999 = vsel %vm998, %v991, %v995
        %v1000 = vand.u32 2147483647, %v665
        %vm1001 = vcmp.eq.f32.partialorder %v1000, 8.507059e+37
        %v1002 = vand.u32 %v665, 2147483648
        %v1003 = vor.u32 1.1754944e-38, %v1002
        %v1004 = vsel %vm1001, %v1003, %v999
        %v1005 = vmul.f32 1.0, %v1004
        %v1006 = vrcp.pop %v666
        %v1007 = vmul.f32 %v666, %v1006
        %v1008 = vsub.f32 1.0, %v1007
        %v1009 = vmul.f32 %v1006, %v1008
        %v1010 = vadd.f32 %v1006, %v1009
        %vm1011 = vweird.f32 %v666
        %vm1012 = vweird.f32 %v1006
        %vm1013 = vmor %vm1011, %vm1012
        %v1014 = vsel %vm1013, %v1006, %v1010
        %v1015 = vand.u32 2147483647, %v666
        %vm1016 = vcmp.eq.f32.partialorder %v1015, 8.507059e+37
        %v1017 = vand.u32 %v666, 2147483648
        %v1018 = vor.u32 1.1754944e-38, %v1017
        %v1019 = vsel %vm1016, %v1018, %v1014
        %v1020 = vmul.f32 1.0, %v1019
        %v1021 = vrcp.pop %v667
        %v1022 = vmul.f32 %v667, %v1021
        %v1023 = vsub.f32 1.0, %v1022
        %v1024 = vmul.f32 %v1021, %v1023
        %v1025 = vadd.f32 %v1021, %v1024
        %vm1026 = vweird.f32 %v667
        %vm1027 = vweird.f32 %v1021
        %vm1028 = vmor %vm1026, %vm1027
        %v1029 = vsel %vm1028, %v1021, %v1025
        %v1030 = vand.u32 2147483647, %v667
        %vm1031 = vcmp.eq.f32.partialorder %v1030, 8.507059e+37
        %v1032 = vand.u32 %v667, 2147483648
        %v1033 = vor.u32 1.1754944e-38, %v1032
        %v1034 = vsel %vm1031, %v1033, %v1029
        %v1035 = vmul.f32 1.0, %v1034
        %v1036 = vrcp.pop %v668
        %v1037 = vmul.f32 %v668, %v1036
        %v1038 = vsub.f32 1.0, %v1037
        %v1039 = vmul.f32 %v1036, %v1038
        %v1040 = vadd.f32 %v1036, %v1039
        %vm1041 = vweird.f32 %v668
        %vm1042 = vweird.f32 %v1036
        %vm1043 = vmor %vm1041, %vm1042
        %v1044 = vsel %vm1043, %v1036, %v1040
        %v1045 = vand.u32 2147483647, %v668
        %vm1046 = vcmp.eq.f32.partialorder %v1045, 8.507059e+37
        %v1047 = vand.u32 %v668, 2147483648
        %v1048 = vor.u32 1.1754944e-38, %v1047
        %v1049 = vsel %vm1046, %v1048, %v1044
        %v1050 = vmul.f32 1.0, %v1049
        %v1051 = vrcp.pop %v669
        %v1052 = vmul.f32 %v669, %v1051
        %v1053 = vsub.f32 1.0, %v1052
        %v1054 = vmul.f32 %v1051, %v1053
        %v1055 = vadd.f32 %v1051, %v1054
        %vm1056 = vweird.f32 %v669
        %vm1057 = vweird.f32 %v1051
        %vm1058 = vmor %vm1056, %vm1057
        %v1059 = vsel %vm1058, %v1051, %v1055
        %v1060 = vand.u32 2147483647, %v669
        %vm1061 = vcmp.eq.f32.partialorder %v1060, 8.507059e+37
        %v1062 = vand.u32 %v669, 2147483648
        %v1063 = vor.u32 1.1754944e-38, %v1062
        %v1064 = vsel %vm1061, %v1063, %v1059
        %v1065 = vmul.f32 1.0, %v1064
        %v1066 = vrcp.pop %v670
        %v1067 = vmul.f32 %v670, %v1066
        %v1068 = vsub.f32 1.0, %v1067
        %v1069 = vmul.f32 %v1066, %v1068
        %v1070 = vadd.f32 %v1066, %v1069
        %vm1071 = vweird.f32 %v670
        %vm1072 = vweird.f32 %v1066
        %vm1073 = vmor %vm1071, %vm1072
        %v1074 = vsel %vm1073, %v1066, %v1070
        %v1075 = vand.u32 2147483647, %v670
        %vm1076 = vcmp.eq.f32.partialorder %v1075, 8.507059e+37
        %v1077 = vand.u32 %v670, 2147483648
        %v1078 = vor.u32 1.1754944e-38, %v1077
        %v1079 = vsel %vm1076, %v1078, %v1074
        %v1080 = vmul.f32 1.0, %v1079
        %v1081 = vrcp.pop %v671
        %v1082 = vmul.f32 %v671, %v1081
        %v1083 = vsub.f32 1.0, %v1082
        %v1084 = vmul.f32 %v1081, %v1083
        %v1085 = vadd.f32 %v1081, %v1084
        %vm1086 = vweird.f32 %v671
        %vm1087 = vweird.f32 %v1081
        %vm1088 = vmor %vm1086, %vm1087
        %v1089 = vsel %vm1088, %v1081, %v1085
        %v1090 = vand.u32 2147483647, %v671
        %vm1091 = vcmp.eq.f32.partialorder %v1090, 8.507059e+37
        %v1092 = vand.u32 %v671, 2147483648
        %v1093 = vor.u32 1.1754944e-38, %v1092
        %v1094 = vsel %vm1091, %v1093, %v1089
        %v1095 = vmul.f32 1.0, %v1094
        %v1096 = vrcp.pop %v672
        %v1097 = vmul.f32 %v672, %v1096
        %v1098 = vsub.f32 1.0, %v1097
        %v1099 = vmul.f32 %v1096, %v1098
        %v1100 = vadd.f32 %v1096, %v1099
        %vm1101 = vweird.f32 %v672
        %vm1102 = vweird.f32 %v1096
        %vm1103 = vmor %vm1101, %vm1102
        %v1104 = vsel %vm1103, %v1096, %v1100
        %v1105 = vand.u32 2147483647, %v672
        %vm1106 = vcmp.eq.f32.partialorder %v1105, 8.507059e+37
        %v1107 = vand.u32 %v672, 2147483648
        %v1108 = vor.u32 1.1754944e-38, %v1107
        %v1109 = vsel %vm1106, %v1108, %v1104
        %v1110 = vmul.f32 1.0, %v1109
        %v1111 = vrcp.pop %v673
        %v1112 = vmul.f32 %v673, %v1111
        %v1113 = vsub.f32 1.0, %v1112
        %v1114 = vmul.f32 %v1111, %v1113
        %v1115 = vadd.f32 %v1111, %v1114
        %vm1116 = vweird.f32 %v673
        %vm1117 = vweird.f32 %v1111
        %vm1118 = vmor %vm1116, %vm1117
        %v1119 = vsel %vm1118, %v1111, %v1115
        %v1120 = vand.u32 2147483647, %v673
        %vm1121 = vcmp.eq.f32.partialorder %v1120, 8.507059e+37
        %v1122 = vand.u32 %v673, 2147483648
        %v1123 = vor.u32 1.1754944e-38, %v1122
        %v1124 = vsel %vm1121, %v1123, %v1119
        %v1125 = vmul.f32 1.0, %v1124
        %v1126 = vrcp.pop %v674
        %v1127 = vmul.f32 %v674, %v1126
        %v1128 = vsub.f32 1.0, %v1127
        %v1129 = vmul.f32 %v1126, %v1128
        %v1130 = vadd.f32 %v1126, %v1129
        %vm1131 = vweird.f32 %v674
        %vm1132 = vweird.f32 %v1126
        %vm1133 = vmor %vm1131, %vm1132
        %v1134 = vsel %vm1133, %v1126, %v1130
        %v1135 = vand.u32 2147483647, %v674
        %vm1136 = vcmp.eq.f32.partialorder %v1135, 8.507059e+37
        %v1137 = vand.u32 %v674, 2147483648
        %v1138 = vor.u32 1.1754944e-38, %v1137
        %v1139 = vsel %vm1136, %v1138, %v1134
        %v1140 = vmul.f32 1.0, %v1139
        %v1141 = vrcp.pop %v675
        %v1142 = vmul.f32 %v675, %v1141
        %v1143 = vsub.f32 1.0, %v1142
        %v1144 = vmul.f32 %v1141, %v1143
        %v1145 = vadd.f32 %v1141, %v1144
        %vm1146 = vweird.f32 %v675
        %vm1147 = vweird.f32 %v1141
        %vm1148 = vmor %vm1146, %vm1147
        %v1149 = vsel %vm1148, %v1141, %v1145
        %v1150 = vand.u32 2147483647, %v675
        %vm1151 = vcmp.eq.f32.partialorder %v1150, 8.507059e+37
        %v1152 = vand.u32 %v675, 2147483648
        %v1153 = vor.u32 1.1754944e-38, %v1152
        %v1154 = vsel %vm1151, %v1153, %v1149
        %v1155 = vmul.f32 1.0, %v1154
        %v1156 = vmul.f32 %v453, %v690
        %v1157 = vmul.f32 %v456, %v705
        %v1158 = vmul.f32 %v459, %v720
        %v1159 = vmul.f32 %v462, %v735
        %v1160 = vmul.f32 %v465, %v750
        %v1161 = vmul.f32 %v468, %v765
        %v1162 = vmul.f32 %v471, %v780
        %v1163 = vmul.f32 %v474, %v795
        %v1164 = vmul.f32 %v477, %v810
        %v1165 = vmul.f32 %v480, %v825
        %v1166 = vmul.f32 %v483, %v840
        %v1167 = vmul.f32 %v486, %v855
        %v1168 = vmul.f32 %v489, %v870
        %v1169 = vmul.f32 %v492, %v885
        %v1170 = vmul.f32 %v495, %v900
        %v1171 = vmul.f32 %v498, %v915
        %v1172 = vmul.f32 %v501, %v930
        %v1173 = vmul.f32 %v504, %v945
        %v1174 = vmul.f32 %v507, %v960
        %v1175 = vmul.f32 %v510, %v975
        %v1176 = vmul.f32 %v513, %v990
        %v1177 = vmul.f32 %v516, %v1005
        %v1178 = vmul.f32 %v519, %v1020
        %v1179 = vmul.f32 %v522, %v1035
        %v1180 = vmul.f32 %v525, %v1050
        %v1181 = vmul.f32 %v528, %v1065
        %v1182 = vmul.f32 %v531, %v1080
        %v1183 = vmul.f32 %v534, %v1095
        %v1184 = vmul.f32 %v537, %v1110
        %v1185 = vmul.f32 %v540, %v1125
        %v1186 = vmul.f32 %v543, %v1140
        %v1187 = vmul.f32 %v546, %v1155
        %v1188 = vld [vmem:[%s3] sm:$0xff]
        %v1189 = vld [vmem:[%s3 + $0x8] sm:$0xff]
        %v1190 = vld [vmem:[%s3 + $0x10] sm:$0xff]
        %v1191 = vld [vmem:[%s3 + $0x18] sm:$0xff]
        %v1192 = vld [vmem:[%s4] sm:$0x1]
        %v1194 = vperm.slane %v1192, 0
        %vm1196 = vcmask 261120
        %v1198 = vsel %vm1196, %v1156, 0
        %v1201 = vsel %vm1196, %v1157, 0
        %v1204 = vsel %vm1196, %v1158, 0
        %v1207 = vsel %vm1196, %v1159, 0
        %v1210 = vsel %vm1196, %v1160, 0
        %v1213 = vsel %vm1196, %v1161, 0
        %v1216 = vsel %vm1196, %v1162, 0
        %v1219 = vsel %vm1196, %v1163, 0
        %v1222 = vsel %vm1196, %v1164, 0
        %v1225 = vsel %vm1196, %v1165, 0
        %v1228 = vsel %vm1196, %v1166, 0
        %v1231 = vsel %vm1196, %v1167, 0
        %v1234 = vsel %vm1196, %v1168, 0
        %v1237 = vsel %vm1196, %v1169, 0
        %v1240 = vsel %vm1196, %v1170, 0
        %v1243 = vsel %vm1196, %v1171, 0
        %v1246 = vsel %vm1196, %v1172, 0
        %v1249 = vsel %vm1196, %v1173, 0
        %v1252 = vsel %vm1196, %v1174, 0
        %v1255 = vsel %vm1196, %v1175, 0
        %v1258 = vsel %vm1196, %v1176, 0
        %v1261 = vsel %vm1196, %v1177, 0
        %v1264 = vsel %vm1196, %v1178, 0
        %v1267 = vsel %vm1196, %v1179, 0
        %v1270 = vsel %vm1196, %v1180, 0
        %v1273 = vsel %vm1196, %v1181, 0
        %v1276 = vsel %vm1196, %v1182, 0
        %v1279 = vsel %vm1196, %v1183, 0
        %v1282 = vsel %vm1196, %v1184, 0
        %v1285 = vsel %vm1196, %v1185, 0
        %v1288 = vsel %vm1196, %v1186, 0
        %v1291 = vsel %vm1196, %v1187, 0
        %1293 = vmatpush.msra.mxu0 0.0
        %1294 = vmatpush.msra.mxu0 0.0
        %1295 = vmatpush.msra.mxu0 0.0
        %1296 = vmatpush.msra.mxu0 0.0
        %1297 = vmatpush.msra.mxu0 0.0
        %1298 = vmatpush.msra.mxu0 0.0
        %1299 = vmatpush.msra.mxu0 0.0
        %1300 = vmatpush.msra.mxu0 0.0
        %1301 = vmatpush.msra.mxu0 0.0
        %1302 = vmatpush.msra.mxu0 0.0
        %1303 = vmatpush.msra.mxu0 0.0
        %1304 = vmatpush.msra.mxu0 0.0
        %1305 = vmatpush.msra.mxu0 %v1191
        %1306 = vmatpush.msra.mxu0 %v1190
        %1307 = vmatpush.msra.mxu0 %v1189
        %1308 = vmatpush.msra.mxu0 %v1188
        %1309 = vmatmul.f32.gmra.mxu0 %v1198
        %v1310 = vpop.f32.mrf.mxu0
        %v1311 = vadd.f32 %v1194, %v1310
        %1312 = vmatmul.f32.gmra.mxu0 %v1201
        %v1313 = vpop.f32.mrf.mxu0
        %v1314 = vadd.f32 %v1194, %v1313
        %1315 = vmatmul.f32.gmra.mxu0 %v1204
        %v1316 = vpop.f32.mrf.mxu0
        %v1317 = vadd.f32 %v1194, %v1316
        %1318 = vmatmul.f32.gmra.mxu0 %v1207
        %v1319 = vpop.f32.mrf.mxu0
        %v1320 = vadd.f32 %v1194, %v1319
        %1321 = vmatmul.f32.gmra.mxu0 %v1210
        %v1322 = vpop.f32.mrf.mxu0
        %v1323 = vadd.f32 %v1194, %v1322
        %1324 = vmatmul.f32.gmra.mxu0 %v1213
        %v1325 = vpop.f32.mrf.mxu0
        %v1326 = vadd.f32 %v1194, %v1325
        %1327 = vmatmul.f32.gmra.mxu0 %v1216
        %v1328 = vpop.f32.mrf.mxu0
        %v1329 = vadd.f32 %v1194, %v1328
        %1330 = vmatmul.f32.gmra.mxu0 %v1219
        %v1331 = vpop.f32.mrf.mxu0
        %v1332 = vadd.f32 %v1194, %v1331
        %1333 = vmatmul.f32.gmra.mxu0 %v1222
        %v1334 = vpop.f32.mrf.mxu0
        %v1335 = vadd.f32 %v1194, %v1334
        %1336 = vmatmul.f32.gmra.mxu0 %v1225
        %v1337 = vpop.f32.mrf.mxu0
        %v1338 = vadd.f32 %v1194, %v1337
        %1339 = vmatmul.f32.gmra.mxu0 %v1228
        %v1340 = vpop.f32.mrf.mxu0
        %v1341 = vadd.f32 %v1194, %v1340
        %1342 = vmatmul.f32.gmra.mxu0 %v1231
        %v1343 = vpop.f32.mrf.mxu0
        %v1344 = vadd.f32 %v1194, %v1343
        %1345 = vmatmul.f32.gmra.mxu0 %v1234
        %v1346 = vpop.f32.mrf.mxu0
        %v1347 = vadd.f32 %v1194, %v1346
        %1348 = vmatmul.f32.gmra.mxu0 %v1237
        %v1349 = vpop.f32.mrf.mxu0
        %v1350 = vadd.f32 %v1194, %v1349
        %1351 = vmatmul.f32.gmra.mxu0 %v1240
        %v1352 = vpop.f32.mrf.mxu0
        %v1353 = vadd.f32 %v1194, %v1352
        %1354 = vmatmul.f32.gmra.mxu0 %v1243
        %v1355 = vpop.f32.mrf.mxu0
        %v1356 = vadd.f32 %v1194, %v1355
        %1357 = vmatmul.f32.gmra.mxu0 %v1246
        %v1358 = vpop.f32.mrf.mxu0
        %v1359 = vadd.f32 %v1194, %v1358
        %1360 = vmatmul.f32.gmra.mxu0 %v1249
        %v1361 = vpop.f32.mrf.mxu0
        %v1362 = vadd.f32 %v1194, %v1361
        %1363 = vmatmul.f32.gmra.mxu0 %v1252
        %v1364 = vpop.f32.mrf.mxu0
        %v1365 = vadd.f32 %v1194, %v1364
        %1366 = vmatmul.f32.gmra.mxu0 %v1255
        %v1367 = vpop.f32.mrf.mxu0
        %v1368 = vadd.f32 %v1194, %v1367
        %1369 = vmatmul.f32.gmra.mxu0 %v1258
        %v1370 = vpop.f32.mrf.mxu0
        %v1371 = vadd.f32 %v1194, %v1370
        %1372 = vmatmul.f32.gmra.mxu0 %v1261
        %v1373 = vpop.f32.mrf.mxu0
        %v1374 = vadd.f32 %v1194, %v1373
        %1375 = vmatmul.f32.gmra.mxu0 %v1264
        %v1376 = vpop.f32.mrf.mxu0
        %v1377 = vadd.f32 %v1194, %v1376
        %1378 = vmatmul.f32.gmra.mxu0 %v1267
        %v1379 = vpop.f32.mrf.mxu0
        %v1380 = vadd.f32 %v1194, %v1379
        %1381 = vmatmul.f32.gmra.mxu0 %v1270
        %v1382 = vpop.f32.mrf.mxu0
        %v1383 = vadd.f32 %v1194, %v1382
        %1384 = vmatmul.f32.gmra.mxu0 %v1273
        %v1385 = vpop.f32.mrf.mxu0
        %v1386 = vadd.f32 %v1194, %v1385
        %1387 = vmatmul.f32.gmra.mxu0 %v1276
        %v1388 = vpop.f32.mrf.mxu0
        %v1389 = vadd.f32 %v1194, %v1388
        %1390 = vmatmul.f32.gmra.mxu0 %v1279
        %v1391 = vpop.f32.mrf.mxu0
        %v1392 = vadd.f32 %v1194, %v1391
        %1393 = vmatmul.f32.gmra.mxu0 %v1282
        %v1394 = vpop.f32.mrf.mxu0
        %v1395 = vadd.f32 %v1194, %v1394
        %1396 = vmatmul.f32.gmra.mxu0 %v1285
        %v1397 = vpop.f32.mrf.mxu0
        %v1398 = vadd.f32 %v1194, %v1397
        %1399 = vmatmul.f32.gmra.mxu0 %v1288
        %v1400 = vpop.f32.mrf.mxu0
        %v1401 = vadd.f32 %v1194, %v1400
        %1402 = vmatmul.f32.gmra.mxu0 %v1291
        %v1403 = vpop.f32.mrf.mxu0
        %v1404 = vadd.f32 %v1194, %v1403
        %1405 = vdwg.mxu0
        %v1406 = vxor.u32 %v1311, 2147483648
        %v1407 = vxor.u32 %v1314, 2147483648
        %v1408 = vxor.u32 %v1317, 2147483648
        %v1409 = vxor.u32 %v1320, 2147483648
        %v1410 = vxor.u32 %v1323, 2147483648
        %v1411 = vxor.u32 %v1326, 2147483648
        %v1412 = vxor.u32 %v1329, 2147483648
        %v1413 = vxor.u32 %v1332, 2147483648
        %v1414 = vxor.u32 %v1335, 2147483648
        %v1415 = vxor.u32 %v1338, 2147483648
        %v1416 = vxor.u32 %v1341, 2147483648
        %v1417 = vxor.u32 %v1344, 2147483648
        %v1418 = vxor.u32 %v1347, 2147483648
        %v1419 = vxor.u32 %v1350, 2147483648
        %v1420 = vxor.u32 %v1353, 2147483648
        %v1421 = vxor.u32 %v1356, 2147483648
        %v1422 = vxor.u32 %v1359, 2147483648
        %v1423 = vxor.u32 %v1362, 2147483648
        %v1424 = vxor.u32 %v1365, 2147483648
        %v1425 = vxor.u32 %v1368, 2147483648
        %v1426 = vxor.u32 %v1371, 2147483648
        %v1427 = vxor.u32 %v1374, 2147483648
        %v1428 = vxor.u32 %v1377, 2147483648
        %v1429 = vxor.u32 %v1380, 2147483648
        %v1430 = vxor.u32 %v1383, 2147483648
        %v1431 = vxor.u32 %v1386, 2147483648
        %v1432 = vxor.u32 %v1389, 2147483648
        %v1433 = vxor.u32 %v1392, 2147483648
        %v1434 = vxor.u32 %v1395, 2147483648
        %v1435 = vxor.u32 %v1398, 2147483648
        %v1436 = vxor.u32 %v1401, 2147483648
        %v1437 = vxor.u32 %v1404, 2147483648
        %v1438 = vmul.f32 %v1406, 1.442695
        %v1439 = vpow.pop %v1438
        %v1440 = vmul.f32 %v1407, 1.442695
        %v1441 = vpow.pop %v1440
        %v1442 = vmul.f32 %v1408, 1.442695
        %v1443 = vpow.pop %v1442
        %v1444 = vmul.f32 %v1409, 1.442695
        %v1445 = vpow.pop %v1444
        %v1446 = vmul.f32 %v1410, 1.442695
        %v1447 = vpow.pop %v1446
        %v1448 = vmul.f32 %v1411, 1.442695
        %v1449 = vpow.pop %v1448
        %v1450 = vmul.f32 %v1412, 1.442695
        %v1451 = vpow.pop %v1450
        %v1452 = vmul.f32 %v1413, 1.442695
        %v1453 = vpow.pop %v1452
        %v1454 = vmul.f32 %v1414, 1.442695
        %v1455 = vpow.pop %v1454
        %v1456 = vmul.f32 %v1415, 1.442695
        %v1457 = vpow.pop %v1456
        %v1458 = vmul.f32 %v1416, 1.442695
        %v1459 = vpow.pop %v1458
        %v1460 = vmul.f32 %v1417, 1.442695
        %v1461 = vpow.pop %v1460
        %v1462 = vmul.f32 %v1418, 1.442695
        %v1463 = vpow.pop %v1462
        %v1464 = vmul.f32 %v1419, 1.442695
        %v1465 = vpow.pop %v1464
        %v1466 = vmul.f32 %v1420, 1.442695
        %v1467 = vpow.pop %v1466
        %v1468 = vmul.f32 %v1421, 1.442695
        %v1469 = vpow.pop %v1468
        %v1470 = vmul.f32 %v1422, 1.442695
        %v1471 = vpow.pop %v1470
        %v1472 = vmul.f32 %v1423, 1.442695
        %v1473 = vpow.pop %v1472
        %v1474 = vmul.f32 %v1424, 1.442695
        %v1475 = vpow.pop %v1474
        %v1476 = vmul.f32 %v1425, 1.442695
        %v1477 = vpow.pop %v1476
        %v1478 = vmul.f32 %v1426, 1.442695
        %v1479 = vpow.pop %v1478
        %v1480 = vmul.f32 %v1427, 1.442695
        %v1481 = vpow.pop %v1480
        %v1482 = vmul.f32 %v1428, 1.442695
        %v1483 = vpow.pop %v1482
        %v1484 = vmul.f32 %v1429, 1.442695
        %v1485 = vpow.pop %v1484
        %v1486 = vmul.f32 %v1430, 1.442695
        %v1487 = vpow.pop %v1486
        %v1488 = vmul.f32 %v1431, 1.442695
        %v1489 = vpow.pop %v1488
        %v1490 = vmul.f32 %v1432, 1.442695
        %v1491 = vpow.pop %v1490
        %v1492 = vmul.f32 %v1433, 1.442695
        %v1493 = vpow.pop %v1492
        %v1494 = vmul.f32 %v1434, 1.442695
        %v1495 = vpow.pop %v1494
        %v1496 = vmul.f32 %v1435, 1.442695
        %v1497 = vpow.pop %v1496
        %v1498 = vmul.f32 %v1436, 1.442695
        %v1499 = vpow.pop %v1498
        %v1500 = vmul.f32 %v1437, 1.442695
        %v1501 = vpow.pop %v1500
        %v1502 = vadd.f32 %v1439, 1.0
        %v1503 = vadd.f32 %v1441, 1.0
        %v1504 = vadd.f32 %v1443, 1.0
        %v1505 = vadd.f32 %v1445, 1.0
        %v1506 = vadd.f32 %v1447, 1.0
        %v1507 = vadd.f32 %v1449, 1.0
        %v1508 = vadd.f32 %v1451, 1.0
        %v1509 = vadd.f32 %v1453, 1.0
        %v1510 = vadd.f32 %v1455, 1.0
        %v1511 = vadd.f32 %v1457, 1.0
        %v1512 = vadd.f32 %v1459, 1.0
        %v1513 = vadd.f32 %v1461, 1.0
        %v1514 = vadd.f32 %v1463, 1.0
        %v1515 = vadd.f32 %v1465, 1.0
        %v1516 = vadd.f32 %v1467, 1.0
        %v1517 = vadd.f32 %v1469, 1.0
        %v1518 = vadd.f32 %v1471, 1.0
        %v1519 = vadd.f32 %v1473, 1.0
        %v1520 = vadd.f32 %v1475, 1.0
        %v1521 = vadd.f32 %v1477, 1.0
        %v1522 = vadd.f32 %v1479, 1.0
        %v1523 = vadd.f32 %v1481, 1.0
        %v1524 = vadd.f32 %v1483, 1.0
        %v1525 = vadd.f32 %v1485, 1.0
        %v1526 = vadd.f32 %v1487, 1.0
        %v1527 = vadd.f32 %v1489, 1.0
        %v1528 = vadd.f32 %v1491, 1.0
        %v1529 = vadd.f32 %v1493, 1.0
        %v1530 = vadd.f32 %v1495, 1.0
        %v1531 = vadd.f32 %v1497, 1.0
        %v1532 = vadd.f32 %v1499, 1.0
        %v1533 = vadd.f32 %v1501, 1.0
        %v1534 = vrcp.pop %v1502
        %v1535 = vmul.f32 %v1502, %v1534
        %v1536 = vsub.f32 1.0, %v1535
        %v1537 = vmul.f32 %v1534, %v1536
        %v1538 = vadd.f32 %v1534, %v1537
        %vm1539 = vweird.f32 %v1502
        %vm1540 = vweird.f32 %v1534
        %vm1541 = vmor %vm1539, %vm1540
        %v1542 = vsel %vm1541, %v1534, %v1538
        %v1543 = vand.u32 2147483647, %v1502
        %vm1544 = vcmp.eq.f32.partialorder %v1543, 8.507059e+37
        %v1545 = vand.u32 %v1502, 2147483648
        %v1546 = vor.u32 1.1754944e-38, %v1545
        %v1547 = vsel %vm1544, %v1546, %v1542
        %v1548 = vmul.f32 1.0, %v1547
        %v1549 = vrcp.pop %v1503
        %v1550 = vmul.f32 %v1503, %v1549
        %v1551 = vsub.f32 1.0, %v1550
        %v1552 = vmul.f32 %v1549, %v1551
        %v1553 = vadd.f32 %v1549, %v1552
        %vm1554 = vweird.f32 %v1503
        %vm1555 = vweird.f32 %v1549
        %vm1556 = vmor %vm1554, %vm1555
        %v1557 = vsel %vm1556, %v1549, %v1553
        %v1558 = vand.u32 2147483647, %v1503
        %vm1559 = vcmp.eq.f32.partialorder %v1558, 8.507059e+37
        %v1560 = vand.u32 %v1503, 2147483648
        %v1561 = vor.u32 1.1754944e-38, %v1560
        %v1562 = vsel %vm1559, %v1561, %v1557
        %v1563 = vmul.f32 1.0, %v1562
        %v1564 = vrcp.pop %v1504
        %v1565 = vmul.f32 %v1504, %v1564
        %v1566 = vsub.f32 1.0, %v1565
        %v1567 = vmul.f32 %v1564, %v1566
        %v1568 = vadd.f32 %v1564, %v1567
        %vm1569 = vweird.f32 %v1504
        %vm1570 = vweird.f32 %v1564
        %vm1571 = vmor %vm1569, %vm1570
        %v1572 = vsel %vm1571, %v1564, %v1568
        %v1573 = vand.u32 2147483647, %v1504
        %vm1574 = vcmp.eq.f32.partialorder %v1573, 8.507059e+37
        %v1575 = vand.u32 %v1504, 2147483648
        %v1576 = vor.u32 1.1754944e-38, %v1575
        %v1577 = vsel %vm1574, %v1576, %v1572
        %v1578 = vmul.f32 1.0, %v1577
        %v1579 = vrcp.pop %v1505
        %v1580 = vmul.f32 %v1505, %v1579
        %v1581 = vsub.f32 1.0, %v1580
        %v1582 = vmul.f32 %v1579, %v1581
        %v1583 = vadd.f32 %v1579, %v1582
        %vm1584 = vweird.f32 %v1505
        %vm1585 = vweird.f32 %v1579
        %vm1586 = vmor %vm1584, %vm1585
        %v1587 = vsel %vm1586, %v1579, %v1583
        %v1588 = vand.u32 2147483647, %v1505
        %vm1589 = vcmp.eq.f32.partialorder %v1588, 8.507059e+37
        %v1590 = vand.u32 %v1505, 2147483648
        %v1591 = vor.u32 1.1754944e-38, %v1590
        %v1592 = vsel %vm1589, %v1591, %v1587
        %v1593 = vmul.f32 1.0, %v1592
        %v1594 = vrcp.pop %v1506
        %v1595 = vmul.f32 %v1506, %v1594
        %v1596 = vsub.f32 1.0, %v1595
        %v1597 = vmul.f32 %v1594, %v1596
        %v1598 = vadd.f32 %v1594, %v1597
        %vm1599 = vweird.f32 %v1506
        %vm1600 = vweird.f32 %v1594
        %vm1601 = vmor %vm1599, %vm1600
        %v1602 = vsel %vm1601, %v1594, %v1598
        %v1603 = vand.u32 2147483647, %v1506
        %vm1604 = vcmp.eq.f32.partialorder %v1603, 8.507059e+37
        %v1605 = vand.u32 %v1506, 2147483648
        %v1606 = vor.u32 1.1754944e-38, %v1605
        %v1607 = vsel %vm1604, %v1606, %v1602
        %v1608 = vmul.f32 1.0, %v1607
        %v1609 = vrcp.pop %v1507
        %v1610 = vmul.f32 %v1507, %v1609
        %v1611 = vsub.f32 1.0, %v1610
        %v1612 = vmul.f32 %v1609, %v1611
        %v1613 = vadd.f32 %v1609, %v1612
        %vm1614 = vweird.f32 %v1507
        %vm1615 = vweird.f32 %v1609
        %vm1616 = vmor %vm1614, %vm1615
        %v1617 = vsel %vm1616, %v1609, %v1613
        %v1618 = vand.u32 2147483647, %v1507
        %vm1619 = vcmp.eq.f32.partialorder %v1618, 8.507059e+37
        %v1620 = vand.u32 %v1507, 2147483648
        %v1621 = vor.u32 1.1754944e-38, %v1620
        %v1622 = vsel %vm1619, %v1621, %v1617
        %v1623 = vmul.f32 1.0, %v1622
        %v1624 = vrcp.pop %v1508
        %v1625 = vmul.f32 %v1508, %v1624
        %v1626 = vsub.f32 1.0, %v1625
        %v1627 = vmul.f32 %v1624, %v1626
        %v1628 = vadd.f32 %v1624, %v1627
        %vm1629 = vweird.f32 %v1508
        %vm1630 = vweird.f32 %v1624
        %vm1631 = vmor %vm1629, %vm1630
        %v1632 = vsel %vm1631, %v1624, %v1628
        %v1633 = vand.u32 2147483647, %v1508
        %vm1634 = vcmp.eq.f32.partialorder %v1633, 8.507059e+37
        %v1635 = vand.u32 %v1508, 2147483648
        %v1636 = vor.u32 1.1754944e-38, %v1635
        %v1637 = vsel %vm1634, %v1636, %v1632
        %v1638 = vmul.f32 1.0, %v1637
        %v1639 = vrcp.pop %v1509
        %v1640 = vmul.f32 %v1509, %v1639
        %v1641 = vsub.f32 1.0, %v1640
        %v1642 = vmul.f32 %v1639, %v1641
        %v1643 = vadd.f32 %v1639, %v1642
        %vm1644 = vweird.f32 %v1509
        %vm1645 = vweird.f32 %v1639
        %vm1646 = vmor %vm1644, %vm1645
        %v1647 = vsel %vm1646, %v1639, %v1643
        %v1648 = vand.u32 2147483647, %v1509
        %vm1649 = vcmp.eq.f32.partialorder %v1648, 8.507059e+37
        %v1650 = vand.u32 %v1509, 2147483648
        %v1651 = vor.u32 1.1754944e-38, %v1650
        %v1652 = vsel %vm1649, %v1651, %v1647
        %v1653 = vmul.f32 1.0, %v1652
        %v1654 = vrcp.pop %v1510
        %v1655 = vmul.f32 %v1510, %v1654
        %v1656 = vsub.f32 1.0, %v1655
        %v1657 = vmul.f32 %v1654, %v1656
        %v1658 = vadd.f32 %v1654, %v1657
        %vm1659 = vweird.f32 %v1510
        %vm1660 = vweird.f32 %v1654
        %vm1661 = vmor %vm1659, %vm1660
        %v1662 = vsel %vm1661, %v1654, %v1658
        %v1663 = vand.u32 2147483647, %v1510
        %vm1664 = vcmp.eq.f32.partialorder %v1663, 8.507059e+37
        %v1665 = vand.u32 %v1510, 2147483648
        %v1666 = vor.u32 1.1754944e-38, %v1665
        %v1667 = vsel %vm1664, %v1666, %v1662
        %v1668 = vmul.f32 1.0, %v1667
        %v1669 = vrcp.pop %v1511
        %v1670 = vmul.f32 %v1511, %v1669
        %v1671 = vsub.f32 1.0, %v1670
        %v1672 = vmul.f32 %v1669, %v1671
        %v1673 = vadd.f32 %v1669, %v1672
        %vm1674 = vweird.f32 %v1511
        %vm1675 = vweird.f32 %v1669
        %vm1676 = vmor %vm1674, %vm1675
        %v1677 = vsel %vm1676, %v1669, %v1673
        %v1678 = vand.u32 2147483647, %v1511
        %vm1679 = vcmp.eq.f32.partialorder %v1678, 8.507059e+37
        %v1680 = vand.u32 %v1511, 2147483648
        %v1681 = vor.u32 1.1754944e-38, %v1680
        %v1682 = vsel %vm1679, %v1681, %v1677
        %v1683 = vmul.f32 1.0, %v1682
        %v1684 = vrcp.pop %v1512
        %v1685 = vmul.f32 %v1512, %v1684
        %v1686 = vsub.f32 1.0, %v1685
        %v1687 = vmul.f32 %v1684, %v1686
        %v1688 = vadd.f32 %v1684, %v1687
        %vm1689 = vweird.f32 %v1512
        %vm1690 = vweird.f32 %v1684
        %vm1691 = vmor %vm1689, %vm1690
        %v1692 = vsel %vm1691, %v1684, %v1688
        %v1693 = vand.u32 2147483647, %v1512
        %vm1694 = vcmp.eq.f32.partialorder %v1693, 8.507059e+37
        %v1695 = vand.u32 %v1512, 2147483648
        %v1696 = vor.u32 1.1754944e-38, %v1695
        %v1697 = vsel %vm1694, %v1696, %v1692
        %v1698 = vmul.f32 1.0, %v1697
        %v1699 = vrcp.pop %v1513
        %v1700 = vmul.f32 %v1513, %v1699
        %v1701 = vsub.f32 1.0, %v1700
        %v1702 = vmul.f32 %v1699, %v1701
        %v1703 = vadd.f32 %v1699, %v1702
        %vm1704 = vweird.f32 %v1513
        %vm1705 = vweird.f32 %v1699
        %vm1706 = vmor %vm1704, %vm1705
        %v1707 = vsel %vm1706, %v1699, %v1703
        %v1708 = vand.u32 2147483647, %v1513
        %vm1709 = vcmp.eq.f32.partialorder %v1708, 8.507059e+37
        %v1710 = vand.u32 %v1513, 2147483648
        %v1711 = vor.u32 1.1754944e-38, %v1710
        %v1712 = vsel %vm1709, %v1711, %v1707
        %v1713 = vmul.f32 1.0, %v1712
        %v1714 = vrcp.pop %v1514
        %v1715 = vmul.f32 %v1514, %v1714
        %v1716 = vsub.f32 1.0, %v1715
        %v1717 = vmul.f32 %v1714, %v1716
        %v1718 = vadd.f32 %v1714, %v1717
        %vm1719 = vweird.f32 %v1514
        %vm1720 = vweird.f32 %v1714
        %vm1721 = vmor %vm1719, %vm1720
        %v1722 = vsel %vm1721, %v1714, %v1718
        %v1723 = vand.u32 2147483647, %v1514
        %vm1724 = vcmp.eq.f32.partialorder %v1723, 8.507059e+37
        %v1725 = vand.u32 %v1514, 2147483648
        %v1726 = vor.u32 1.1754944e-38, %v1725
        %v1727 = vsel %vm1724, %v1726, %v1722
        %v1728 = vmul.f32 1.0, %v1727
        %v1729 = vrcp.pop %v1515
        %v1730 = vmul.f32 %v1515, %v1729
        %v1731 = vsub.f32 1.0, %v1730
        %v1732 = vmul.f32 %v1729, %v1731
        %v1733 = vadd.f32 %v1729, %v1732
        %vm1734 = vweird.f32 %v1515
        %vm1735 = vweird.f32 %v1729
        %vm1736 = vmor %vm1734, %vm1735
        %v1737 = vsel %vm1736, %v1729, %v1733
        %v1738 = vand.u32 2147483647, %v1515
        %vm1739 = vcmp.eq.f32.partialorder %v1738, 8.507059e+37
        %v1740 = vand.u32 %v1515, 2147483648
        %v1741 = vor.u32 1.1754944e-38, %v1740
        %v1742 = vsel %vm1739, %v1741, %v1737
        %v1743 = vmul.f32 1.0, %v1742
        %v1744 = vrcp.pop %v1516
        %v1745 = vmul.f32 %v1516, %v1744
        %v1746 = vsub.f32 1.0, %v1745
        %v1747 = vmul.f32 %v1744, %v1746
        %v1748 = vadd.f32 %v1744, %v1747
        %vm1749 = vweird.f32 %v1516
        %vm1750 = vweird.f32 %v1744
        %vm1751 = vmor %vm1749, %vm1750
        %v1752 = vsel %vm1751, %v1744, %v1748
        %v1753 = vand.u32 2147483647, %v1516
        %vm1754 = vcmp.eq.f32.partialorder %v1753, 8.507059e+37
        %v1755 = vand.u32 %v1516, 2147483648
        %v1756 = vor.u32 1.1754944e-38, %v1755
        %v1757 = vsel %vm1754, %v1756, %v1752
        %v1758 = vmul.f32 1.0, %v1757
        %v1759 = vrcp.pop %v1517
        %v1760 = vmul.f32 %v1517, %v1759
        %v1761 = vsub.f32 1.0, %v1760
        %v1762 = vmul.f32 %v1759, %v1761
        %v1763 = vadd.f32 %v1759, %v1762
        %vm1764 = vweird.f32 %v1517
        %vm1765 = vweird.f32 %v1759
        %vm1766 = vmor %vm1764, %vm1765
        %v1767 = vsel %vm1766, %v1759, %v1763
        %v1768 = vand.u32 2147483647, %v1517
        %vm1769 = vcmp.eq.f32.partialorder %v1768, 8.507059e+37
        %v1770 = vand.u32 %v1517, 2147483648
        %v1771 = vor.u32 1.1754944e-38, %v1770
        %v1772 = vsel %vm1769, %v1771, %v1767
        %v1773 = vmul.f32 1.0, %v1772
        %v1774 = vrcp.pop %v1518
        %v1775 = vmul.f32 %v1518, %v1774
        %v1776 = vsub.f32 1.0, %v1775
        %v1777 = vmul.f32 %v1774, %v1776
        %v1778 = vadd.f32 %v1774, %v1777
        %vm1779 = vweird.f32 %v1518
        %vm1780 = vweird.f32 %v1774
        %vm1781 = vmor %vm1779, %vm1780
        %v1782 = vsel %vm1781, %v1774, %v1778
        %v1783 = vand.u32 2147483647, %v1518
        %vm1784 = vcmp.eq.f32.partialorder %v1783, 8.507059e+37
        %v1785 = vand.u32 %v1518, 2147483648
        %v1786 = vor.u32 1.1754944e-38, %v1785
        %v1787 = vsel %vm1784, %v1786, %v1782
        %v1788 = vmul.f32 1.0, %v1787
        %v1789 = vrcp.pop %v1519
        %v1790 = vmul.f32 %v1519, %v1789
        %v1791 = vsub.f32 1.0, %v1790
        %v1792 = vmul.f32 %v1789, %v1791
        %v1793 = vadd.f32 %v1789, %v1792
        %vm1794 = vweird.f32 %v1519
        %vm1795 = vweird.f32 %v1789
        %vm1796 = vmor %vm1794, %vm1795
        %v1797 = vsel %vm1796, %v1789, %v1793
        %v1798 = vand.u32 2147483647, %v1519
        %vm1799 = vcmp.eq.f32.partialorder %v1798, 8.507059e+37
        %v1800 = vand.u32 %v1519, 2147483648
        %v1801 = vor.u32 1.1754944e-38, %v1800
        %v1802 = vsel %vm1799, %v1801, %v1797
        %v1803 = vmul.f32 1.0, %v1802
        %v1804 = vrcp.pop %v1520
        %v1805 = vmul.f32 %v1520, %v1804
        %v1806 = vsub.f32 1.0, %v1805
        %v1807 = vmul.f32 %v1804, %v1806
        %v1808 = vadd.f32 %v1804, %v1807
        %vm1809 = vweird.f32 %v1520
        %vm1810 = vweird.f32 %v1804
        %vm1811 = vmor %vm1809, %vm1810
        %v1812 = vsel %vm1811, %v1804, %v1808
        %v1813 = vand.u32 2147483647, %v1520
        %vm1814 = vcmp.eq.f32.partialorder %v1813, 8.507059e+37
        %v1815 = vand.u32 %v1520, 2147483648
        %v1816 = vor.u32 1.1754944e-38, %v1815
        %v1817 = vsel %vm1814, %v1816, %v1812
        %v1818 = vmul.f32 1.0, %v1817
        %v1819 = vrcp.pop %v1521
        %v1820 = vmul.f32 %v1521, %v1819
        %v1821 = vsub.f32 1.0, %v1820
        %v1822 = vmul.f32 %v1819, %v1821
        %v1823 = vadd.f32 %v1819, %v1822
        %vm1824 = vweird.f32 %v1521
        %vm1825 = vweird.f32 %v1819
        %vm1826 = vmor %vm1824, %vm1825
        %v1827 = vsel %vm1826, %v1819, %v1823
        %v1828 = vand.u32 2147483647, %v1521
        %vm1829 = vcmp.eq.f32.partialorder %v1828, 8.507059e+37
        %v1830 = vand.u32 %v1521, 2147483648
        %v1831 = vor.u32 1.1754944e-38, %v1830
        %v1832 = vsel %vm1829, %v1831, %v1827
        %v1833 = vmul.f32 1.0, %v1832
        %v1834 = vrcp.pop %v1522
        %v1835 = vmul.f32 %v1522, %v1834
        %v1836 = vsub.f32 1.0, %v1835
        %v1837 = vmul.f32 %v1834, %v1836
        %v1838 = vadd.f32 %v1834, %v1837
        %vm1839 = vweird.f32 %v1522
        %vm1840 = vweird.f32 %v1834
        %vm1841 = vmor %vm1839, %vm1840
        %v1842 = vsel %vm1841, %v1834, %v1838
        %v1843 = vand.u32 2147483647, %v1522
        %vm1844 = vcmp.eq.f32.partialorder %v1843, 8.507059e+37
        %v1845 = vand.u32 %v1522, 2147483648
        %v1846 = vor.u32 1.1754944e-38, %v1845
        %v1847 = vsel %vm1844, %v1846, %v1842
        %v1848 = vmul.f32 1.0, %v1847
        %v1849 = vrcp.pop %v1523
        %v1850 = vmul.f32 %v1523, %v1849
        %v1851 = vsub.f32 1.0, %v1850
        %v1852 = vmul.f32 %v1849, %v1851
        %v1853 = vadd.f32 %v1849, %v1852
        %vm1854 = vweird.f32 %v1523
        %vm1855 = vweird.f32 %v1849
        %vm1856 = vmor %vm1854, %vm1855
        %v1857 = vsel %vm1856, %v1849, %v1853
        %v1858 = vand.u32 2147483647, %v1523
        %vm1859 = vcmp.eq.f32.partialorder %v1858, 8.507059e+37
        %v1860 = vand.u32 %v1523, 2147483648
        %v1861 = vor.u32 1.1754944e-38, %v1860
        %v1862 = vsel %vm1859, %v1861, %v1857
        %v1863 = vmul.f32 1.0, %v1862
        %v1864 = vrcp.pop %v1524
        %v1865 = vmul.f32 %v1524, %v1864
        %v1866 = vsub.f32 1.0, %v1865
        %v1867 = vmul.f32 %v1864, %v1866
        %v1868 = vadd.f32 %v1864, %v1867
        %vm1869 = vweird.f32 %v1524
        %vm1870 = vweird.f32 %v1864
        %vm1871 = vmor %vm1869, %vm1870
        %v1872 = vsel %vm1871, %v1864, %v1868
        %v1873 = vand.u32 2147483647, %v1524
        %vm1874 = vcmp.eq.f32.partialorder %v1873, 8.507059e+37
        %v1875 = vand.u32 %v1524, 2147483648
        %v1876 = vor.u32 1.1754944e-38, %v1875
        %v1877 = vsel %vm1874, %v1876, %v1872
        %v1878 = vmul.f32 1.0, %v1877
        %v1879 = vrcp.pop %v1525
        %v1880 = vmul.f32 %v1525, %v1879
        %v1881 = vsub.f32 1.0, %v1880
        %v1882 = vmul.f32 %v1879, %v1881
        %v1883 = vadd.f32 %v1879, %v1882
        %vm1884 = vweird.f32 %v1525
        %vm1885 = vweird.f32 %v1879
        %vm1886 = vmor %vm1884, %vm1885
        %v1887 = vsel %vm1886, %v1879, %v1883
        %v1888 = vand.u32 2147483647, %v1525
        %vm1889 = vcmp.eq.f32.partialorder %v1888, 8.507059e+37
        %v1890 = vand.u32 %v1525, 2147483648
        %v1891 = vor.u32 1.1754944e-38, %v1890
        %v1892 = vsel %vm1889, %v1891, %v1887
        %v1893 = vmul.f32 1.0, %v1892
        %v1894 = vrcp.pop %v1526
        %v1895 = vmul.f32 %v1526, %v1894
        %v1896 = vsub.f32 1.0, %v1895
        %v1897 = vmul.f32 %v1894, %v1896
        %v1898 = vadd.f32 %v1894, %v1897
        %vm1899 = vweird.f32 %v1526
        %vm1900 = vweird.f32 %v1894
        %vm1901 = vmor %vm1899, %vm1900
        %v1902 = vsel %vm1901, %v1894, %v1898
        %v1903 = vand.u32 2147483647, %v1526
        %vm1904 = vcmp.eq.f32.partialorder %v1903, 8.507059e+37
        %v1905 = vand.u32 %v1526, 2147483648
        %v1906 = vor.u32 1.1754944e-38, %v1905
        %v1907 = vsel %vm1904, %v1906, %v1902
        %v1908 = vmul.f32 1.0, %v1907
        %v1909 = vrcp.pop %v1527
        %v1910 = vmul.f32 %v1527, %v1909
        %v1911 = vsub.f32 1.0, %v1910
        %v1912 = vmul.f32 %v1909, %v1911
        %v1913 = vadd.f32 %v1909, %v1912
        %vm1914 = vweird.f32 %v1527
        %vm1915 = vweird.f32 %v1909
        %vm1916 = vmor %vm1914, %vm1915
        %v1917 = vsel %vm1916, %v1909, %v1913
        %v1918 = vand.u32 2147483647, %v1527
        %vm1919 = vcmp.eq.f32.partialorder %v1918, 8.507059e+37
        %v1920 = vand.u32 %v1527, 2147483648
        %v1921 = vor.u32 1.1754944e-38, %v1920
        %v1922 = vsel %vm1919, %v1921, %v1917
        %v1923 = vmul.f32 1.0, %v1922
        %v1924 = vrcp.pop %v1528
        %v1925 = vmul.f32 %v1528, %v1924
        %v1926 = vsub.f32 1.0, %v1925
        %v1927 = vmul.f32 %v1924, %v1926
        %v1928 = vadd.f32 %v1924, %v1927
        %vm1929 = vweird.f32 %v1528
        %vm1930 = vweird.f32 %v1924
        %vm1931 = vmor %vm1929, %vm1930
        %v1932 = vsel %vm1931, %v1924, %v1928
        %v1933 = vand.u32 2147483647, %v1528
        %vm1934 = vcmp.eq.f32.partialorder %v1933, 8.507059e+37
        %v1935 = vand.u32 %v1528, 2147483648
        %v1936 = vor.u32 1.1754944e-38, %v1935
        %v1937 = vsel %vm1934, %v1936, %v1932
        %v1938 = vmul.f32 1.0, %v1937
        %v1939 = vrcp.pop %v1529
        %v1940 = vmul.f32 %v1529, %v1939
        %v1941 = vsub.f32 1.0, %v1940
        %v1942 = vmul.f32 %v1939, %v1941
        %v1943 = vadd.f32 %v1939, %v1942
        %vm1944 = vweird.f32 %v1529
        %vm1945 = vweird.f32 %v1939
        %vm1946 = vmor %vm1944, %vm1945
        %v1947 = vsel %vm1946, %v1939, %v1943
        %v1948 = vand.u32 2147483647, %v1529
        %vm1949 = vcmp.eq.f32.partialorder %v1948, 8.507059e+37
        %v1950 = vand.u32 %v1529, 2147483648
        %v1951 = vor.u32 1.1754944e-38, %v1950
        %v1952 = vsel %vm1949, %v1951, %v1947
        %v1953 = vmul.f32 1.0, %v1952
        %v1954 = vrcp.pop %v1530
        %v1955 = vmul.f32 %v1530, %v1954
        %v1956 = vsub.f32 1.0, %v1955
        %v1957 = vmul.f32 %v1954, %v1956
        %v1958 = vadd.f32 %v1954, %v1957
        %vm1959 = vweird.f32 %v1530
        %vm1960 = vweird.f32 %v1954
        %vm1961 = vmor %vm1959, %vm1960
        %v1962 = vsel %vm1961, %v1954, %v1958
        %v1963 = vand.u32 2147483647, %v1530
        %vm1964 = vcmp.eq.f32.partialorder %v1963, 8.507059e+37
        %v1965 = vand.u32 %v1530, 2147483648
        %v1966 = vor.u32 1.1754944e-38, %v1965
        %v1967 = vsel %vm1964, %v1966, %v1962
        %v1968 = vmul.f32 1.0, %v1967
        %v1969 = vrcp.pop %v1531
        %v1970 = vmul.f32 %v1531, %v1969
        %v1971 = vsub.f32 1.0, %v1970
        %v1972 = vmul.f32 %v1969, %v1971
        %v1973 = vadd.f32 %v1969, %v1972
        %vm1974 = vweird.f32 %v1531
        %vm1975 = vweird.f32 %v1969
        %vm1976 = vmor %vm1974, %vm1975
        %v1977 = vsel %vm1976, %v1969, %v1973
        %v1978 = vand.u32 2147483647, %v1531
        %vm1979 = vcmp.eq.f32.partialorder %v1978, 8.507059e+37
        %v1980 = vand.u32 %v1531, 2147483648
        %v1981 = vor.u32 1.1754944e-38, %v1980
        %v1982 = vsel %vm1979, %v1981, %v1977
        %v1983 = vmul.f32 1.0, %v1982
        %v1984 = vrcp.pop %v1532
        %v1985 = vmul.f32 %v1532, %v1984
        %v1986 = vsub.f32 1.0, %v1985
        %v1987 = vmul.f32 %v1984, %v1986
        %v1988 = vadd.f32 %v1984, %v1987
        %vm1989 = vweird.f32 %v1532
        %vm1990 = vweird.f32 %v1984
        %vm1991 = vmor %vm1989, %vm1990
        %v1992 = vsel %vm1991, %v1984, %v1988
        %v1993 = vand.u32 2147483647, %v1532
        %vm1994 = vcmp.eq.f32.partialorder %v1993, 8.507059e+37
        %v1995 = vand.u32 %v1532, 2147483648
        %v1996 = vor.u32 1.1754944e-38, %v1995
        %v1997 = vsel %vm1994, %v1996, %v1992
        %v1998 = vmul.f32 1.0, %v1997
        %v1999 = vrcp.pop %v1533
        %v2000 = vmul.f32 %v1533, %v1999
        %v2001 = vsub.f32 1.0, %v2000
        %v2002 = vmul.f32 %v1999, %v2001
        %v2003 = vadd.f32 %v1999, %v2002
        %vm2004 = vweird.f32 %v1533
        %vm2005 = vweird.f32 %v1999
        %vm2006 = vmor %vm2004, %vm2005
        %v2007 = vsel %vm2006, %v1999, %v2003
        %v2008 = vand.u32 2147483647, %v1533
        %vm2009 = vcmp.eq.f32.partialorder %v2008, 8.507059e+37
        %v2010 = vand.u32 %v1533, 2147483648
        %v2011 = vor.u32 1.1754944e-38, %v2010
        %v2012 = vsel %vm2009, %v2011, %v2007
        %v2013 = vmul.f32 1.0, %v2012
        %v2014 = vmul.f32 %v1311, %v1548
        %v2015 = vmul.f32 %v1314, %v1563
        %v2016 = vmul.f32 %v1317, %v1578
        %v2017 = vmul.f32 %v1320, %v1593
        %v2018 = vmul.f32 %v1323, %v1608
        %v2019 = vmul.f32 %v1326, %v1623
        %v2020 = vmul.f32 %v1329, %v1638
        %v2021 = vmul.f32 %v1332, %v1653
        %v2022 = vmul.f32 %v1335, %v1668
        %v2023 = vmul.f32 %v1338, %v1683
        %v2024 = vmul.f32 %v1341, %v1698
        %v2025 = vmul.f32 %v1344, %v1713
        %v2026 = vmul.f32 %v1347, %v1728
        %v2027 = vmul.f32 %v1350, %v1743
        %v2028 = vmul.f32 %v1353, %v1758
        %v2029 = vmul.f32 %v1356, %v1773
        %v2030 = vmul.f32 %v1359, %v1788
        %v2031 = vmul.f32 %v1362, %v1803
        %v2032 = vmul.f32 %v1365, %v1818
        %v2033 = vmul.f32 %v1368, %v1833
        %v2034 = vmul.f32 %v1371, %v1848
        %v2035 = vmul.f32 %v1374, %v1863
        %v2036 = vmul.f32 %v1377, %v1878
        %v2037 = vmul.f32 %v1380, %v1893
        %v2038 = vmul.f32 %v1383, %v1908
        %v2039 = vmul.f32 %v1386, %v1923
        %v2040 = vmul.f32 %v1389, %v1938
        %v2041 = vmul.f32 %v1392, %v1953
        %v2042 = vmul.f32 %v1395, %v1968
        %v2043 = vmul.f32 %v1398, %v1983
        %v2044 = vmul.f32 %v1401, %v1998
        %v2045 = vmul.f32 %v1404, %v2013
        %v2046 = vld [vmem:[%s5] sm:$0xff]
        %v2047 = vld [vmem:[%s5 + $0x8] sm:$0xff]
        %v2048 = vld [vmem:[%s5 + $0x10] sm:$0xff]
        %v2049 = vld [vmem:[%s5 + $0x18] sm:$0xff]
        %v2050 = vld [vmem:[%s5 + $0x20] sm:$0xff]
        %v2051 = vld [vmem:[%s5 + $0x28] sm:$0xff]
        %v2052 = vld [vmem:[%s5 + $0x30] sm:$0xff]
        %v2053 = vld [vmem:[%s5 + $0x38] sm:$0xff]
        %v2054 = vld [vmem:[%s6] sm:$0x1]
        %v2056 = vperm.slane %v2054, 0
        %vm2058 = vcmask 523264
        %v2060 = vsel %vm2058, %v2014, 0
        %v2063 = vsel %vm2058, %v2015, 0
        %v2066 = vsel %vm2058, %v2016, 0
        %v2069 = vsel %vm2058, %v2017, 0
        %v2072 = vsel %vm2058, %v2018, 0
        %v2075 = vsel %vm2058, %v2019, 0
        %v2078 = vsel %vm2058, %v2020, 0
        %v2081 = vsel %vm2058, %v2021, 0
        %v2084 = vsel %vm2058, %v2022, 0
        %v2087 = vsel %vm2058, %v2023, 0
        %v2090 = vsel %vm2058, %v2024, 0
        %v2093 = vsel %vm2058, %v2025, 0
        %v2096 = vsel %vm2058, %v2026, 0
        %v2099 = vsel %vm2058, %v2027, 0
        %v2102 = vsel %vm2058, %v2028, 0
        %v2105 = vsel %vm2058, %v2029, 0
        %v2108 = vsel %vm2058, %v2030, 0
        %v2111 = vsel %vm2058, %v2031, 0
        %v2114 = vsel %vm2058, %v2032, 0
        %v2117 = vsel %vm2058, %v2033, 0
        %v2120 = vsel %vm2058, %v2034, 0
        %v2123 = vsel %vm2058, %v2035, 0
        %v2126 = vsel %vm2058, %v2036, 0
        %v2129 = vsel %vm2058, %v2037, 0
        %v2132 = vsel %vm2058, %v2038, 0
        %v2135 = vsel %vm2058, %v2039, 0
        %v2138 = vsel %vm2058, %v2040, 0
        %v2141 = vsel %vm2058, %v2041, 0
        %v2144 = vsel %vm2058, %v2042, 0
        %v2147 = vsel %vm2058, %v2043, 0
        %v2150 = vsel %vm2058, %v2044, 0
        %v2153 = vsel %vm2058, %v2045, 0
        %2155 = vmatpush.msra.mxu0 0.0
        %2156 = vmatpush.msra.mxu0 0.0
        %2157 = vmatpush.msra.mxu0 0.0
        %2158 = vmatpush.msra.mxu0 0.0
        %2159 = vmatpush.msra.mxu0 0.0
        %2160 = vmatpush.msra.mxu0 0.0
        %2161 = vmatpush.msra.mxu0 0.0
        %2162 = vmatpush.msra.mxu0 0.0
        %2163 = vmatpush.msra.mxu0 %v2053
        %2164 = vmatpush.msra.mxu0 %v2052
        %2165 = vmatpush.msra.mxu0 %v2051
        %2166 = vmatpush.msra.mxu0 %v2050
        %2167 = vmatpush.msra.mxu0 %v2049
        %2168 = vmatpush.msra.mxu0 %v2048
        %2169 = vmatpush.msra.mxu0 %v2047
        %2170 = vmatpush.msra.mxu0 %v2046
        %2171 = vmatmul.f32.gmra.mxu0 %v2060
        %v2172 = vpop.f32.mrf.mxu0
        %v2173 = vadd.f32 %v2056, %v2172
        %2174 = vmatmul.f32.gmra.mxu0 %v2063
        %v2175 = vpop.f32.mrf.mxu0
        %v2176 = vadd.f32 %v2056, %v2175
        %2177 = vmatmul.f32.gmra.mxu0 %v2066
        %v2178 = vpop.f32.mrf.mxu0
        %v2179 = vadd.f32 %v2056, %v2178
        %2180 = vmatmul.f32.gmra.mxu0 %v2069
        %v2181 = vpop.f32.mrf.mxu0
        %v2182 = vadd.f32 %v2056, %v2181
        %2183 = vmatmul.f32.gmra.mxu0 %v2072
        %v2184 = vpop.f32.mrf.mxu0
        %v2185 = vadd.f32 %v2056, %v2184
        %2186 = vmatmul.f32.gmra.mxu0 %v2075
        %v2187 = vpop.f32.mrf.mxu0
        %v2188 = vadd.f32 %v2056, %v2187
        %2189 = vmatmul.f32.gmra.mxu0 %v2078
        %v2190 = vpop.f32.mrf.mxu0
        %v2191 = vadd.f32 %v2056, %v2190
        %2192 = vmatmul.f32.gmra.mxu0 %v2081
        %v2193 = vpop.f32.mrf.mxu0
        %v2194 = vadd.f32 %v2056, %v2193
        %2195 = vmatmul.f32.gmra.mxu0 %v2084
        %v2196 = vpop.f32.mrf.mxu0
        %v2197 = vadd.f32 %v2056, %v2196
        %2198 = vmatmul.f32.gmra.mxu0 %v2087
        %v2199 = vpop.f32.mrf.mxu0
        %v2200 = vadd.f32 %v2056, %v2199
        %2201 = vmatmul.f32.gmra.mxu0 %v2090
        %v2202 = vpop.f32.mrf.mxu0
        %v2203 = vadd.f32 %v2056, %v2202
        %2204 = vmatmul.f32.gmra.mxu0 %v2093
        %v2205 = vpop.f32.mrf.mxu0
        %v2206 = vadd.f32 %v2056, %v2205
        %2207 = vmatmul.f32.gmra.mxu0 %v2096
        %v2208 = vpop.f32.mrf.mxu0
        %v2209 = vadd.f32 %v2056, %v2208
        %2210 = vmatmul.f32.gmra.mxu0 %v2099
        %v2211 = vpop.f32.mrf.mxu0
        %v2212 = vadd.f32 %v2056, %v2211
        %2213 = vmatmul.f32.gmra.mxu0 %v2102
        %v2214 = vpop.f32.mrf.mxu0
        %v2215 = vadd.f32 %v2056, %v2214
        %2216 = vmatmul.f32.gmra.mxu0 %v2105
        %v2217 = vpop.f32.mrf.mxu0
        %v2218 = vadd.f32 %v2056, %v2217
        %2219 = vmatmul.f32.gmra.mxu0 %v2108
        %v2220 = vpop.f32.mrf.mxu0
        %v2221 = vadd.f32 %v2056, %v2220
        %2222 = vmatmul.f32.gmra.mxu0 %v2111
        %v2223 = vpop.f32.mrf.mxu0
        %v2224 = vadd.f32 %v2056, %v2223
        %2225 = vmatmul.f32.gmra.mxu0 %v2114
        %v2226 = vpop.f32.mrf.mxu0
        %v2227 = vadd.f32 %v2056, %v2226
        %2228 = vmatmul.f32.gmra.mxu0 %v2117
        %v2229 = vpop.f32.mrf.mxu0
        %v2230 = vadd.f32 %v2056, %v2229
        %2231 = vmatmul.f32.gmra.mxu0 %v2120
        %v2232 = vpop.f32.mrf.mxu0
        %v2233 = vadd.f32 %v2056, %v2232
        %2234 = vmatmul.f32.gmra.mxu0 %v2123
        %v2235 = vpop.f32.mrf.mxu0
        %v2236 = vadd.f32 %v2056, %v2235
        %2237 = vmatmul.f32.gmra.mxu0 %v2126
        %v2238 = vpop.f32.mrf.mxu0
        %v2239 = vadd.f32 %v2056, %v2238
        %2240 = vmatmul.f32.gmra.mxu0 %v2129
        %v2241 = vpop.f32.mrf.mxu0
        %v2242 = vadd.f32 %v2056, %v2241
        %2243 = vmatmul.f32.gmra.mxu0 %v2132
        %v2244 = vpop.f32.mrf.mxu0
        %v2245 = vadd.f32 %v2056, %v2244
        %2246 = vmatmul.f32.gmra.mxu0 %v2135
        %v2247 = vpop.f32.mrf.mxu0
        %v2248 = vadd.f32 %v2056, %v2247
        %2249 = vmatmul.f32.gmra.mxu0 %v2138
        %v2250 = vpop.f32.mrf.mxu0
        %v2251 = vadd.f32 %v2056, %v2250
        %2252 = vmatmul.f32.gmra.mxu0 %v2141
        %v2253 = vpop.f32.mrf.mxu0
        %v2254 = vadd.f32 %v2056, %v2253
        %2255 = vmatmul.f32.gmra.mxu0 %v2144
        %v2256 = vpop.f32.mrf.mxu0
        %v2257 = vadd.f32 %v2056, %v2256
        %2258 = vmatmul.f32.gmra.mxu0 %v2147
        %v2259 = vpop.f32.mrf.mxu0
        %v2260 = vadd.f32 %v2056, %v2259
        %2261 = vmatmul.f32.gmra.mxu0 %v2150
        %v2262 = vpop.f32.mrf.mxu0
        %v2263 = vadd.f32 %v2056, %v2262
        %2264 = vmatmul.f32.gmra.mxu0 %v2153
        %v2265 = vpop.f32.mrf.mxu0
        %v2266 = vadd.f32 %v2056, %v2265
        %2267 = vdwg.mxu0
        %vm2268 = vcmask 64512
        %2269 = vst.msk [vmem:[%s280] sm:$0xff] %vm2268, %v2173
        %2270 = vst.msk [vmem:[%s280 + $0x8] sm:$0xff] %vm2268, %v2176
        %2271 = vst.msk [vmem:[%s280 + $0x10] sm:$0xff] %vm2268, %v2179
        %2272 = vst.msk [vmem:[%s280 + $0x18] sm:$0xff] %vm2268, %v2182
        %2273 = vst.msk [vmem:[%s280 + $0x20] sm:$0xff] %vm2268, %v2185
        %2274 = vst.msk [vmem:[%s280 + $0x28] sm:$0xff] %vm2268, %v2188
        %2275 = vst.msk [vmem:[%s280 + $0x30] sm:$0xff] %vm2268, %v2191
        %2276 = vst.msk [vmem:[%s280 + $0x38] sm:$0xff] %vm2268, %v2194
        %2277 = vst.msk [vmem:[%s280 + $0x40] sm:$0xff] %vm2268, %v2197
        %2278 = vst.msk [vmem:[%s280 + $0x48] sm:$0xff] %vm2268, %v2200
        %2279 = vst.msk [vmem:[%s280 + $0x50] sm:$0xff] %vm2268, %v2203
        %2280 = vst.msk [vmem:[%s280 + $0x58] sm:$0xff] %vm2268, %v2206
        %2281 = vst.msk [vmem:[%s280 + $0x60] sm:$0xff] %vm2268, %v2209
        %2282 = vst.msk [vmem:[%s280 + $0x68] sm:$0xff] %vm2268, %v2212
        %2283 = vst.msk [vmem:[%s280 + $0x70] sm:$0xff] %vm2268, %v2215
        %2284 = vst.msk [vmem:[%s280 + $0x78] sm:$0xff] %vm2268, %v2218
        %2285 = vst.msk [vmem:[%s280 + $0x80] sm:$0xff] %vm2268, %v2221
        %2286 = vst.msk [vmem:[%s280 + $0x88] sm:$0xff] %vm2268, %v2224
        %2287 = vst.msk [vmem:[%s280 + $0x90] sm:$0xff] %vm2268, %v2227
        %2288 = vst.msk [vmem:[%s280 + $0x98] sm:$0xff] %vm2268, %v2230
        %2289 = vst.msk [vmem:[%s280 + $0xa0] sm:$0xff] %vm2268, %v2233
        %2290 = vst.msk [vmem:[%s280 + $0xa8] sm:$0xff] %vm2268, %v2236
        %2291 = vst.msk [vmem:[%s280 + $0xb0] sm:$0xff] %vm2268, %v2239
        %2292 = vst.msk [vmem:[%s280 + $0xb8] sm:$0xff] %vm2268, %v2242
        %2293 = vst.msk [vmem:[%s280 + $0xc0] sm:$0xff] %vm2268, %v2245
        %2294 = vst.msk [vmem:[%s280 + $0xc8] sm:$0xff] %vm2268, %v2248
        %2295 = vst.msk [vmem:[%s280 + $0xd0] sm:$0xff] %vm2268, %v2251
        %2296 = vst.msk [vmem:[%s280 + $0xd8] sm:$0xff] %vm2268, %v2254
        %2297 = vst.msk [vmem:[%s280 + $0xe0] sm:$0xff] %vm2268, %v2257
        %2298 = vst.msk [vmem:[%s280 + $0xe8] sm:$0xff] %vm2268, %v2260
        %2299 = vst.msk [vmem:[%s280 + $0xf0] sm:$0xff] %vm2268, %v2263
        %2300 = vst.msk [vmem:[%s280 + $0xf8] sm:$0xff] %vm2268, %v2266
        %s2301 = sand.u32 %s178, 1
        %s2302 = sand.u32 %s178, 1
        %s2303 = smul.addr %s2302, 256
        %s2304 = scalar_lea.vmem [#allocation2], %s2303
        // Predicated region
        $region49: #{tpu_custom_call.1} parent=47 // pred_check
          %p2305 = pneg %p188
        $region50: #{tpu_custom_call.1} parent=47 // pred_check_branch
          %2307 = sbr.rel (%p2305) target = $region52
        $region51: #{tpu_custom_call.1} parent=47 // pred_region
          %s2308 = smul.u32 32, %s18
          %s2309 = ssub.s32 63, %s2308
          %p2310 = scmp.lt.s32.totalorder %s2309, 32
          %s2311 = scalar_select %p2310, %s2309, 32
          %s2312 = smul.u32 8, %s2311
          %p2313 = scmp.ne.s32.totalorder 0, %s2312
          %s2314 = smul.addr %s2308, 8
          %s2315 = scalar_lea.vmem %s7, %s2314
          // Predicated region
          $region53: #{tpu_custom_call.1} parent=51 // pred_check
            %p2316 = pneg %p2313
          $region54: #{tpu_custom_call.1} parent=51 // pred_check_branch
            %2318 = sbr.rel (%p2316) target = $region56
          $region55: #{tpu_custom_call.1} parent=51 // pred_region
            // Predicated region
            $region57: #{tpu_custom_call.1} parent=55 // pred_check
              _
            $region58: #{tpu_custom_call.1} parent=55 // pred_check_branch
              %2320 = sbr.rel (0) target = $region60
            $region59: #{tpu_custom_call.1} parent=55 // pred_region
              // Predicated region
              $region79: #{tpu_custom_call.1} parent=59 // pred_check
                _
              $region80: #{tpu_custom_call.1} parent=59 // pred_check_branch
                %2432 = sbr.rel (0) target = $region82
              $region81: #{tpu_custom_call.1} parent=59 // pred_region
                %s2433 = sshrl.u32 %s2311, 5
                // While loop
                $region83: #{tpu_custom_call.1} parent=81 // loop_pre_header
                  _
                $region84: #{tpu_custom_call.1} parent=81 // loop_header
                  %s2435 = sphi 0, %s2437
                  %p2436 = scmp.ge.s32.totalorder %s2435, %s2433
                  %s2440 = sphi 0, %s2509
                  %s2441 = sphi %s2304, %s2512
                  %s2442 = sphi %s2315, %s2513
                $region85: #{tpu_custom_call.1} parent=81 // loop_header_branch
                  %2439 = sbr.rel (%p2436) target = $region89
                $region86: #{tpu_custom_call.1} parent=81 // loop_body
                  %v2443 = vld [vmem:[%s2441] sm:$0xff]
                  %2444 = vst [vmem:[%s2442] sm:$0xff] %v2443
                  %v2445 = vld [vmem:[%s2441 + $0x8] sm:$0xff]
                  %2446 = vst [vmem:[%s2442 + $0x8] sm:$0xff] %v2445
                  %v2447 = vld [vmem:[%s2441 + $0x10] sm:$0xff]
                  %2448 = vst [vmem:[%s2442 + $0x10] sm:$0xff] %v2447
                  %v2449 = vld [vmem:[%s2441 + $0x18] sm:$0xff]
                  %2450 = vst [vmem:[%s2442 + $0x18] sm:$0xff] %v2449
                  %v2451 = vld [vmem:[%s2441 + $0x20] sm:$0xff]
                  %2452 = vst [vmem:[%s2442 + $0x20] sm:$0xff] %v2451
                  %v2453 = vld [vmem:[%s2441 + $0x28] sm:$0xff]
                  %2454 = vst [vmem:[%s2442 + $0x28] sm:$0xff] %v2453
                  %v2455 = vld [vmem:[%s2441 + $0x30] sm:$0xff]
                  %2456 = vst [vmem:[%s2442 + $0x30] sm:$0xff] %v2455
                  %v2457 = vld [vmem:[%s2441 + $0x38] sm:$0xff]
                  %2458 = vst [vmem:[%s2442 + $0x38] sm:$0xff] %v2457
                  %v2459 = vld [vmem:[%s2441 + $0x40] sm:$0xff]
                  %2460 = vst [vmem:[%s2442 + $0x40] sm:$0xff] %v2459
                  %v2461 = vld [vmem:[%s2441 + $0x48] sm:$0xff]
                  %2462 = vst [vmem:[%s2442 + $0x48] sm:$0xff] %v2461
                  %v2463 = vld [vmem:[%s2441 + $0x50] sm:$0xff]
                  %2464 = vst [vmem:[%s2442 + $0x50] sm:$0xff] %v2463
                  %v2465 = vld [vmem:[%s2441 + $0x58] sm:$0xff]
                  %2466 = vst [vmem:[%s2442 + $0x58] sm:$0xff] %v2465
                  %v2467 = vld [vmem:[%s2441 + $0x60] sm:$0xff]
                  %2468 = vst [vmem:[%s2442 + $0x60] sm:$0xff] %v2467
                  %v2469 = vld [vmem:[%s2441 + $0x68] sm:$0xff]
                  %2470 = vst [vmem:[%s2442 + $0x68] sm:$0xff] %v2469
                  %v2471 = vld [vmem:[%s2441 + $0x70] sm:$0xff]
                  %2472 = vst [vmem:[%s2442 + $0x70] sm:$0xff] %v2471
                  %v2473 = vld [vmem:[%s2441 + $0x78] sm:$0xff]
                  %2474 = vst [vmem:[%s2442 + $0x78] sm:$0xff] %v2473
                  %v2475 = vld [vmem:[%s2441 + $0x80] sm:$0xff]
                  %2476 = vst [vmem:[%s2442 + $0x80] sm:$0xff] %v2475
                  %v2477 = vld [vmem:[%s2441 + $0x88] sm:$0xff]
                  %2478 = vst [vmem:[%s2442 + $0x88] sm:$0xff] %v2477
                  %v2479 = vld [vmem:[%s2441 + $0x90] sm:$0xff]
                  %2480 = vst [vmem:[%s2442 + $0x90] sm:$0xff] %v2479
                  %v2481 = vld [vmem:[%s2441 + $0x98] sm:$0xff]
                  %2482 = vst [vmem:[%s2442 + $0x98] sm:$0xff] %v2481
                  %v2483 = vld [vmem:[%s2441 + $0xa0] sm:$0xff]
                  %2484 = vst [vmem:[%s2442 + $0xa0] sm:$0xff] %v2483
                  %v2485 = vld [vmem:[%s2441 + $0xa8] sm:$0xff]
                  %2486 = vst [vmem:[%s2442 + $0xa8] sm:$0xff] %v2485
                  %v2487 = vld [vmem:[%s2441 + $0xb0] sm:$0xff]
                  %2488 = vst [vmem:[%s2442 + $0xb0] sm:$0xff] %v2487
                  %v2489 = vld [vmem:[%s2441 + $0xb8] sm:$0xff]
                  %2490 = vst [vmem:[%s2442 + $0xb8] sm:$0xff] %v2489
                  %v2491 = vld [vmem:[%s2441 + $0xc0] sm:$0xff]
                  %2492 = vst [vmem:[%s2442 + $0xc0] sm:$0xff] %v2491
                  %v2493 = vld [vmem:[%s2441 + $0xc8] sm:$0xff]
                  %2494 = vst [vmem:[%s2442 + $0xc8] sm:$0xff] %v2493
                  %v2495 = vld [vmem:[%s2441 + $0xd0] sm:$0xff]
                  %2496 = vst [vmem:[%s2442 + $0xd0] sm:$0xff] %v2495
                  %v2497 = vld [vmem:[%s2441 + $0xd8] sm:$0xff]
                  %2498 = vst [vmem:[%s2442 + $0xd8] sm:$0xff] %v2497
                  %v2499 = vld [vmem:[%s2441 + $0xe0] sm:$0xff]
                  %2500 = vst [vmem:[%s2442 + $0xe0] sm:$0xff] %v2499
                  %v2501 = vld [vmem:[%s2441 + $0xe8] sm:$0xff]
                  %2502 = vst [vmem:[%s2442 + $0xe8] sm:$0xff] %v2501
                  %v2503 = vld [vmem:[%s2441 + $0xf0] sm:$0xff]
                  %2504 = vst [vmem:[%s2442 + $0xf0] sm:$0xff] %v2503
                  %v2505 = vld [vmem:[%s2441 + $0xf8] sm:$0xff]
                  %2506 = vst [vmem:[%s2442 + $0xf8] sm:$0xff] %v2505
                  %s2507 = sadd.s32 1, %s2440
                  %p2508 = scmp.ge.s32.totalorder %s2507, %s2433
                  %s2509 = scalar_select %p2508, 0, %s2507
                  %s2510 = smul.u32 %s2509, 256
                  %s2511 = smul.u32 %s2509, 256
                  %s2512 = scalar_lea.vmem %s2304, %s2510 [#allocation2]
                  %s2513 = scalar_lea.vmem %s2315, %s2511
                $region87: #{tpu_custom_call.1} parent=81 // loop_footer
                  %s2437 = sadd.s32 %s2435, 1
                $region88: #{tpu_custom_call.1} parent=81 // loop_footer_branch
                  %2434 = sbr.rel target = $region84
                $region89: #{tpu_custom_call.1} parent=81 // loop_exit
                  _
                %s2514 = sshrl.u32 %s2311, 5
                %s2515 = sand.u32 %s2311, 31
                %s2516 = smul.u32 %s2514, 32
                %s2517 = smul.u32 8, %s2516
                %s2518 = scalar_lea.vmem %s2304, %s2517 [#allocation2]
                %s2519 = smul.u32 8, %s2516
                %s2520 = scalar_lea.vmem %s2315, %s2519
                // While loop
                $region90: #{tpu_custom_call.1} parent=81 // loop_pre_header
                  _
                $region91: #{tpu_custom_call.1} parent=81 // loop_header
                  %s2522 = sphi 0, %s2524
                  %p2523 = scmp.ge.s32.totalorder %s2522, %s2515
                  %s2527 = sphi 0, %s2534
                  %s2528 = sphi %s2518, %s2537
                  %s2529 = sphi %s2520, %s2538
                $region92: #{tpu_custom_call.1} parent=81 // loop_header_branch
                  %2526 = sbr.rel (%p2523) target = $region96
                $region93: #{tpu_custom_call.1} parent=81 // loop_body
                  %v2530 = vld [vmem:[%s2528] sm:$0xff]
                  %2531 = vst [vmem:[%s2529] sm:$0xff] %v2530
                  %s2532 = sadd.s32 1, %s2527
                  %p2533 = scmp.ge.s32.totalorder %s2532, %s2515
                  %s2534 = scalar_select %p2533, 0, %s2532
                  %s2535 = smul.u32 %s2534, 8
                  %s2536 = smul.u32 %s2534, 8
                  %s2537 = scalar_lea.vmem %s2518, %s2535 [#allocation2]
                  %s2538 = scalar_lea.vmem %s2520, %s2536
                $region94: #{tpu_custom_call.1} parent=81 // loop_footer
                  %s2524 = sadd.s32 %s2522, 1
                $region95: #{tpu_custom_call.1} parent=81 // loop_footer_branch
                  %2521 = sbr.rel target = $region91
                $region96: #{tpu_custom_call.1} parent=81 // loop_exit
                  _
              $region82: #{tpu_custom_call.1} parent=59 // pred_fallthru
                _
              // Predicated region
              $region97: #{tpu_custom_call.1} parent=59 // pred_check
                _
              $region98: #{tpu_custom_call.1} parent=59 // pred_check_branch
                %2540 = sbr.rel target = $region100
              $region99: #{tpu_custom_call.1} parent=59 // pred_region
                _
              $region100: #{tpu_custom_call.1} parent=59 // pred_fallthru
                _
            $region60: #{tpu_custom_call.1} parent=55 // pred_fallthru
              _
            // Predicated region
            $region61: #{tpu_custom_call.1} parent=55 // pred_check
              _
            $region62: #{tpu_custom_call.1} parent=55 // pred_check_branch
              %2322 = sbr.rel target = $region64
            $region63: #{tpu_custom_call.1} parent=55 // pred_region
              %s2324 = ssub.s32 256, 1
              %s2325 = sshrl.u32 %s2311, 5
              // While loop
              $region65: #{tpu_custom_call.1} parent=63 // loop_pre_header
                _
              $region66: #{tpu_custom_call.1} parent=63 // loop_header
                %s2327 = sphi 0, %s2329
                %p2328 = scmp.ge.s32.totalorder %s2327, %s2325
                %s2332 = sphi 0, %s2401
                %s2333 = sphi %s2304, %s2404
                %s2334 = sphi %s2315, %s2405
              $region67: #{tpu_custom_call.1} parent=63 // loop_header_branch
                %2331 = sbr.rel (%p2328) target = $region71
              $region68: #{tpu_custom_call.1} parent=63 // loop_body
                %v2335 = vld [vmem:[%s2333] sm:%s2324]
                %2336 = vst [vmem:[%s2334] sm:%s2324] %v2335
                %v2337 = vld [vmem:[%s2333 + $0x8] sm:%s2324]
                %2338 = vst [vmem:[%s2334 + $0x8] sm:%s2324] %v2337
                %v2339 = vld [vmem:[%s2333 + $0x10] sm:%s2324]
                %2340 = vst [vmem:[%s2334 + $0x10] sm:%s2324] %v2339
                %v2341 = vld [vmem:[%s2333 + $0x18] sm:%s2324]
                %2342 = vst [vmem:[%s2334 + $0x18] sm:%s2324] %v2341
                %v2343 = vld [vmem:[%s2333 + $0x20] sm:%s2324]
                %2344 = vst [vmem:[%s2334 + $0x20] sm:%s2324] %v2343
                %v2345 = vld [vmem:[%s2333 + $0x28] sm:%s2324]
                %2346 = vst [vmem:[%s2334 + $0x28] sm:%s2324] %v2345
                %v2347 = vld [vmem:[%s2333 + $0x30] sm:%s2324]
                %2348 = vst [vmem:[%s2334 + $0x30] sm:%s2324] %v2347
                %v2349 = vld [vmem:[%s2333 + $0x38] sm:%s2324]
                %2350 = vst [vmem:[%s2334 + $0x38] sm:%s2324] %v2349
                %v2351 = vld [vmem:[%s2333 + $0x40] sm:%s2324]
                %2352 = vst [vmem:[%s2334 + $0x40] sm:%s2324] %v2351
                %v2353 = vld [vmem:[%s2333 + $0x48] sm:%s2324]
                %2354 = vst [vmem:[%s2334 + $0x48] sm:%s2324] %v2353
                %v2355 = vld [vmem:[%s2333 + $0x50] sm:%s2324]
                %2356 = vst [vmem:[%s2334 + $0x50] sm:%s2324] %v2355
                %v2357 = vld [vmem:[%s2333 + $0x58] sm:%s2324]
                %2358 = vst [vmem:[%s2334 + $0x58] sm:%s2324] %v2357
                %v2359 = vld [vmem:[%s2333 + $0x60] sm:%s2324]
                %2360 = vst [vmem:[%s2334 + $0x60] sm:%s2324] %v2359
                %v2361 = vld [vmem:[%s2333 + $0x68] sm:%s2324]
                %2362 = vst [vmem:[%s2334 + $0x68] sm:%s2324] %v2361
                %v2363 = vld [vmem:[%s2333 + $0x70] sm:%s2324]
                %2364 = vst [vmem:[%s2334 + $0x70] sm:%s2324] %v2363
                %v2365 = vld [vmem:[%s2333 + $0x78] sm:%s2324]
                %2366 = vst [vmem:[%s2334 + $0x78] sm:%s2324] %v2365
                %v2367 = vld [vmem:[%s2333 + $0x80] sm:%s2324]
                %2368 = vst [vmem:[%s2334 + $0x80] sm:%s2324] %v2367
                %v2369 = vld [vmem:[%s2333 + $0x88] sm:%s2324]
                %2370 = vst [vmem:[%s2334 + $0x88] sm:%s2324] %v2369
                %v2371 = vld [vmem:[%s2333 + $0x90] sm:%s2324]
                %2372 = vst [vmem:[%s2334 + $0x90] sm:%s2324] %v2371
                %v2373 = vld [vmem:[%s2333 + $0x98] sm:%s2324]
                %2374 = vst [vmem:[%s2334 + $0x98] sm:%s2324] %v2373
                %v2375 = vld [vmem:[%s2333 + $0xa0] sm:%s2324]
                %2376 = vst [vmem:[%s2334 + $0xa0] sm:%s2324] %v2375
                %v2377 = vld [vmem:[%s2333 + $0xa8] sm:%s2324]
                %2378 = vst [vmem:[%s2334 + $0xa8] sm:%s2324] %v2377
                %v2379 = vld [vmem:[%s2333 + $0xb0] sm:%s2324]
                %2380 = vst [vmem:[%s2334 + $0xb0] sm:%s2324] %v2379
                %v2381 = vld [vmem:[%s2333 + $0xb8] sm:%s2324]
                %2382 = vst [vmem:[%s2334 + $0xb8] sm:%s2324] %v2381
                %v2383 = vld [vmem:[%s2333 + $0xc0] sm:%s2324]
                %2384 = vst [vmem:[%s2334 + $0xc0] sm:%s2324] %v2383
                %v2385 = vld [vmem:[%s2333 + $0xc8] sm:%s2324]
                %2386 = vst [vmem:[%s2334 + $0xc8] sm:%s2324] %v2385
                %v2387 = vld [vmem:[%s2333 + $0xd0] sm:%s2324]
                %2388 = vst [vmem:[%s2334 + $0xd0] sm:%s2324] %v2387
                %v2389 = vld [vmem:[%s2333 + $0xd8] sm:%s2324]
                %2390 = vst [vmem:[%s2334 + $0xd8] sm:%s2324] %v2389
                %v2391 = vld [vmem:[%s2333 + $0xe0] sm:%s2324]
                %2392 = vst [vmem:[%s2334 + $0xe0] sm:%s2324] %v2391
                %v2393 = vld [vmem:[%s2333 + $0xe8] sm:%s2324]
                %2394 = vst [vmem:[%s2334 + $0xe8] sm:%s2324] %v2393
                %v2395 = vld [vmem:[%s2333 + $0xf0] sm:%s2324]
                %2396 = vst [vmem:[%s2334 + $0xf0] sm:%s2324] %v2395
                %v2397 = vld [vmem:[%s2333 + $0xf8] sm:%s2324]
                %2398 = vst [vmem:[%s2334 + $0xf8] sm:%s2324] %v2397
                %s2399 = sadd.s32 1, %s2332
                %p2400 = scmp.ge.s32.totalorder %s2399, %s2325
                %s2401 = scalar_select %p2400, 0, %s2399
                %s2402 = smul.u32 %s2401, 256
                %s2403 = smul.u32 %s2401, 256
                %s2404 = scalar_lea.vmem %s2304, %s2402 [#allocation2]
                %s2405 = scalar_lea.vmem %s2315, %s2403
              $region69: #{tpu_custom_call.1} parent=63 // loop_footer
                %s2329 = sadd.s32 %s2327, 1
              $region70: #{tpu_custom_call.1} parent=63 // loop_footer_branch
                %2326 = sbr.rel target = $region66
              $region71: #{tpu_custom_call.1} parent=63 // loop_exit
                _
              %s2406 = sshrl.u32 %s2311, 5
              %s2407 = sand.u32 %s2311, 31
              %s2408 = smul.u32 %s2406, 32
              %s2409 = smul.u32 8, %s2408
              %s2410 = scalar_lea.vmem %s2304, %s2409 [#allocation2]
              %s2411 = smul.u32 8, %s2408
              %s2412 = scalar_lea.vmem %s2315, %s2411
              // While loop
              $region72: #{tpu_custom_call.1} parent=63 // loop_pre_header
                _
              $region73: #{tpu_custom_call.1} parent=63 // loop_header
                %s2414 = sphi 0, %s2416
                %p2415 = scmp.ge.s32.totalorder %s2414, %s2407
                %s2419 = sphi 0, %s2426
                %s2420 = sphi %s2410, %s2429
                %s2421 = sphi %s2412, %s2430
              $region74: #{tpu_custom_call.1} parent=63 // loop_header_branch
                %2418 = sbr.rel (%p2415) target = $region78
              $region75: #{tpu_custom_call.1} parent=63 // loop_body
                %v2422 = vld [vmem:[%s2420] sm:%s2324]
                %2423 = vst [vmem:[%s2421] sm:%s2324] %v2422
                %s2424 = sadd.s32 1, %s2419
                %p2425 = scmp.ge.s32.totalorder %s2424, %s2407
                %s2426 = scalar_select %p2425, 0, %s2424
                %s2427 = smul.u32 %s2426, 8
                %s2428 = smul.u32 %s2426, 8
                %s2429 = scalar_lea.vmem %s2410, %s2427 [#allocation2]
                %s2430 = scalar_lea.vmem %s2412, %s2428
              $region76: #{tpu_custom_call.1} parent=63 // loop_footer
                %s2416 = sadd.s32 %s2414, 1
              $region77: #{tpu_custom_call.1} parent=63 // loop_footer_branch
                %2413 = sbr.rel target = $region73
              $region78: #{tpu_custom_call.1} parent=63 // loop_exit
                _
            $region64: #{tpu_custom_call.1} parent=55 // pred_fallthru
              _
          $region56: #{tpu_custom_call.1} parent=51 // pred_fallthru
            _
          %2541 = vnop
        $region52: #{tpu_custom_call.1} parent=47 // pred_fallthru
          _
      $region48: #{tpu_custom_call.1} parent=5 // pred_fallthru
        _
      %p2542 = scmp.le.s32.totalorder 2, %s13
      // Predicated region
      $region101: #{tpu_custom_call.1} parent=5 // pred_check
        %p2543 = pneg %p2542
      $region102: #{tpu_custom_call.1} parent=5 // pred_check_branch
        %2545 = sbr.rel (%p2543) target = $region104
      $region103: #{tpu_custom_call.1} parent=5 // pred_region
        %s2546 = ssub.s32 %s13, 2
        // Predicated region
        $region105: #{tpu_custom_call.1} parent=103 // pred_check
          %p2547 = pneg %p194
        $region106: #{tpu_custom_call.1} parent=103 // pred_check_branch
          %2549 = sbr.rel (%p2547) target = $region108
        $region107: #{tpu_custom_call.1} parent=103 // pred_region
          %s2550 = sand.u32 %s179, 1
          %s2551 = sand.u32 %s179, 1
          %s2552 = smul.addr %s2551, 256
          %s2553 = scalar_lea.vmem [#allocation2], %s2552
        $region108: #{tpu_custom_call.1} parent=103 // pred_fallthru
          _
      $region104: #{tpu_custom_call.1} parent=5 // pred_fallthru
        _
    $region6: #{tpu_custom_call.1} parent=1 // loop_footer
      %s17 = sadd.s32 1, %s13
    $region7: #{tpu_custom_call.1} parent=1 // loop_footer_branch
      %12 = sbr.rel target = $region3
    $region8: #{tpu_custom_call.1} parent=1 // loop_exit
      _

</llo_original>
